<compile_context>
chip_gen: v7x
topology: tpu7x:2x2x1
jax: 0.10.0
libtpu: 0.0.40
codegen_flags: <defaults>
</compile_context>

<pallas_src>
import numpy as np
import jax
import jax.numpy as jnp
from jax.experimental import pallas as pl
from jax.experimental.pallas import tpu as pltpu


# --------------------------------------------------------------------------- #
# Kernel
# --------------------------------------------------------------------------- #
def momentum_kernel(x_ref, mom_ref, wx_ref, pr_ref, pb_ref, m1_ref, m2_ref,
                    flag_ref, out_ref, newmom_ref):
    Cb, N, V = mom_ref.shape
    B = x_ref.shape[0]

    init = flag_ref[0, 0]                                    # 1.0 on first call

    x2 = x_ref[...]                                          # (B, Cb*V) lane-dense
    xt = jnp.transpose(x2.reshape(B, Cb, V), (1, 0, 2))      # (Cb, B, V)

    # torch: if all(momentum_matrix == 0): momentum <- vector[:, 0:1, :]
    mom = (init * jnp.broadcast_to(xt[:, 0:1, :], (Cb, N, V))
           + (1.0 - init) * mom_ref[...])                    # (Cb, N, V)

    # ---- MXU 1: x-part of the contraction (batched over the channel block) ----
    #   rows [0, N*B)     : EMA-output rows, n-major (row index = n*B + r)
    #   rows [N*B, N*B+N) : new-momentum rows (one per momentum index)
    yx = jnp.einsum('crk,ckv->crv', wx_ref[...], xt,
                    preferred_element_type=jnp.float32,
                    precision=jax.lax.Precision.HIGHEST)     # (Cb, N*B+N, V)
    yx_out = yx[:, :N * B, :].reshape(Cb, N, B, V)           # tile-aligned reshape
    yx_new = yx[:, N * B:, :]                                # (Cb, N, V)

    # ---- MXU 2: momentum-part of the EMA output (the sum over n is K = N) -----
    m1 = m1_ref[...]                                         # (Cb, N, V)
    out_mom = jnp.einsum('crn,cnv->crv', pr_ref[...], m1 * mom,
                         preferred_element_type=jnp.float32,
                         precision=jax.lax.Precision.HIGHEST)  # (Cb, B, V)

    # ---- VPU: m1-weighted mix of the x-part (single hoisted broadcast) --------
    mix = jnp.sum(m1[:, :, None, :] * yx_out, axis=1)        # (Cb, B, V)

    out_native = jnp.transpose(mix + out_mom, (1, 0, 2)).reshape(B, Cb * V)
    out_ref[...] = out_native + m2_ref[...] * x2             # one unmasked store

    # ---- new momentum state ----------------------------------------------------
    newmom_ref[...] = yx_new + pb_ref[...] * mom             # (Cb, N, V)


# --------------------------------------------------------------------------- #
# Parameter-only math (hoisted out of the kernel)
# --------------------------------------------------------------------------- #
def _coef_matrices(p, B):
    """Build the coefficient operands from sigmoid(params) p of shape (C, N).

    Returns
      wx : (C, N*B + N, B)  x-coefficients.  Row n*B + r gives the EMA-output
           row r (r = 0 is the pure momentum pass-through row -> all zeros);
           row N*B + n gives the new-momentum row for momentum index n.
      pr : (C, B, N)        momentum coefficient p^r of EMA-output row r.
      pB : (C, N, 1)        momentum coefficient p^B of the new momentum.
    """
    C, N = p.shape
    rk = np.arange(B)
    # EMA-output rows: Wout[c, n, r, k] = (1 - p) * p^(r-1-k)   for k <= r-1
    e_out = rk[:, None] - 1 - rk[None, :]
    m_out = (e_out >= 0).astype(np.float32)
    e_out = np.maximum(e_out, 0).astype(np.float32)
    p4 = p[:, :, None, None]
    w_out = (1.0 - p4) * (p4 ** e_out) * m_out                     # (C, N, B, B)
    # new-momentum rows: Wnew[c, n, k] = (1 - p) * p^(B-1-k)
    e_new = (B - 1 - rk).astype(np.float32)
    w_new = (1.0 - p[:, :, None]) * (p[:, :, None] ** e_new)       # (C, N, B)

    wx = jnp.concatenate([w_out.reshape(C, N * B, B),
                          w_new.reshape(C, N, B)], axis=1)         # (C, N*B+N, B)
    pr = jnp.transpose(p[:, :, None] ** rk.astype(np.float32), (0, 2, 1))  # (C, B, N)
    pB = (p ** float(B))[:, :, None]                               # (C, N, 1)
    return wx, pr, pB


def _pick_num_blocks(C, Vp):
    """Number of channel blocks (grid steps).

    v7x has two TensorCores -> never leave one idle (G >= 2 when C > 1), prefer
    an even G with >= 2 steps per core; v6e/v5e want a few steps to reach the
    pipelined steady state while keeping blocks wide (fewer, wider steps win on
    the store- / bandwidth-limited v5e)."""
    divisors = [g for g in range(1, C + 1) if C % g == 0]

    def score(g):
        lanes = (C // g) * Vp
        s = 0.0
        if g >= 2:
            s += 8.0          # both v7x cores busy
        if g % 2 == 0:
            s += 4.0          # even split over the two v7x cores
        if g >= 4:
            s += 2.0          # >= 2 steps/core -> prefetch/writeback overlap
        if lanes >= 512:
            s += 1.0          # wide, store-friendly blocks
        if g > 16:
            s -= 0.1 * (g - 16)   # too many tiny steps -> per-step overhead
        return s - 0.01 * g       # ties -> fewer, wider steps

    return max(divisors, key=score)


# --------------------------------------------------------------------------- #
# Wrapper
# --------------------------------------------------------------------------- #
@jax.jit
def momentum_forward(x, momentum_state, params_learnable, learnable_matrix,
                     initialized=None):
    """x: (B, C, V) f32; momentum_state: (C, N, V) f32; params_learnable: (C, N);
    learnable_matrix: (C, 2N+1, V).  `initialized` (optional bool): pass it to
    skip the per-call all-zero scan of the state (torch first-call check).
    Returns (out (B, C, V), new_state (C, N, V))."""
    B, C, V = x.shape
    N = momentum_state.shape[1]

    # first-call condition (torch: torch.all(momentum_matrix == 0))
    if initialized is None:
        do_init = jnp.all(momentum_state == 0.0)
    else:
        do_init = jnp.logical_not(jnp.asarray(initialized, dtype=bool))
    init_f = do_init.astype(jnp.float32).reshape(1, 1)

    # ---- parameter-only math, once per call in XLA ----------------------------
    p = jax.nn.sigmoid(params_learnable)                               # (C, N)
    wx, pr, pB = _coef_matrices(p, B)

    sm = jax.nn.softmax(learnable_matrix, axis=1)                      # (C, 2N+1, V)
    m1 = 2.0 * (sm[:, N + 1:, :] - sm[:, :N, :][:, ::-1, :])           # (C, N, V)
    m2 = 2.0 * jnp.sum(sm[:, :N, :], axis=1) + sm[:, N, :]             # (C, V)

    # ---- pad V to a lane multiple so every slab is lane-aligned ---------------
    Vp = ((V + 127) // 128) * 128
    pad = Vp - V
    if pad:
        x = jnp.pad(x, ((0, 0), (0, 0), (0, pad)))
        momentum_state = jnp.pad(momentum_state, ((0, 0), (0, 0), (0, pad)))
        m1 = jnp.pad(m1, ((0, 0), (0, 0), (0, pad)))
        m2 = jnp.pad(m2, ((0, 0), (0, pad)))

    x2 = x.reshape(B, C * Vp)                 # free view of the contiguous array
    m2r = m2.reshape(1, C * Vp)

    G = _pick_num_blocks(C, Vp)
    Cb = C // G
    R = N * B + N

    blk_bytes = 4 * (2 * B * Cb * Vp          # x + out blocks
                     + 3 * Cb * N * Vp        # state in, m1, state out
                     + Cb * Vp                # m2 row
                     + Cb * (32 + 8 + 8) * 128)   # wx / pr / pB padded VMEM tiles
    vmem_limit = int(min(48 * 2 ** 20, max(16 * 2 ** 20, 8 * blk_bytes)))

    # TODO(synk): callers holding the state long-term should donate it
    # (jit donate_argnums) so the input/output alias below becomes a true
    # in-place update; skipped here so the demo can keep intermediate states.
    out2, new_state = pl.pallas_call(
        momentum_kernel,
        grid=(G,),
        in_specs=[
            pl.BlockSpec((B, Cb * Vp), lambda i: (0, i)),            # x (lane-dense)
            pl.BlockSpec((Cb, N, Vp), lambda i: (i, 0, 0)),          # momentum state
            pl.BlockSpec((Cb, R, B), lambda i: (i, 0, 0)),           # x coefficients
            pl.BlockSpec((Cb, B, N), lambda i: (i, 0, 0)),           # p^r (mom -> out)
            pl.BlockSpec((Cb, N, 1), lambda i: (i, 0, 0)),           # p^B (mom -> new state)
            pl.BlockSpec((Cb, N, Vp), lambda i: (i, 0, 0)),          # m1
            pl.BlockSpec((1, Cb * Vp), lambda i: (0, i)),            # m2 (lane-dense row)
            pl.BlockSpec(memory_space=pltpu.MemorySpace.SMEM),       # init flag (1,1)
        ],
        out_specs=[
            pl.BlockSpec((B, Cb * Vp), lambda i: (0, i)),            # output
            pl.BlockSpec((Cb, N, Vp), lambda i: (i, 0, 0)),          # new momentum state
        ],
        out_shape=[
            jax.ShapeDtypeStruct((B, C * Vp), jnp.float32),
            jax.ShapeDtypeStruct((C, N, Vp), jnp.float32),
        ],
        input_output_aliases={1: 1},                                 # state -> new state
        compiler_params=pltpu.CompilerParams(
            dimension_semantics=("parallel",),
            vmem_limit_bytes=vmem_limit,
        ),
    )(x2, momentum_state, wx, pr, pB, m1, m2r, init_f)

    out = out2.reshape(B, C, Vp)
    if pad:
        out = out[..., :V]
        new_state = new_state[..., :V]
    return out, new_state


# --------------------------------------------------------------------------- #
# Plain-JAX mirror of the torch forward, for verification
# --------------------------------------------------------------------------- #
def reference_forward(x, momentum_state4, params_learnable4, learnable_matrix):
    B, C, V = x.shape
    N = params_learnable4.shape[1]
    exp1 = np.zeros((1, 1, B + 1, B), np.float32)
    exp2 = np.zeros((1, 1, B + 1, B), np.float32)
    for i_ in range(B + 1):
        for j_ in range(B):
            if j_ >= i_:
                exp1[0, 0, i_, j_] = 1 + j_ - i_
            if i_ > 0:
                exp2[0, 0, i_, j_] = 1.0

    vector = jnp.transpose(x, (1, 0, 2))                     # (C, B, V)
    p = jax.nn.sigmoid(params_learnable4)                    # (C, N, 1, 1)
    mul = p ** exp1 * (1 - p) ** exp2                        # (C, N, B+1, B)
    row = np.arange(B + 1)[:, None]
    col = np.arange(B)[None, :]
    mul = jnp.where(col >= row - 1, mul, 0.0)                # triu(diagonal=-1)
    mom = momentum_state4
    if bool(jnp.all(mom == 0)):
        mom = jnp.broadcast_to(vector[:, 0:1, :, None], (C, N, V, 1))
    lhs = jnp.concatenate(
        [mom, jnp.repeat(jnp.transpose(vector, (0, 2, 1))[:, None], N, axis=1)],
        axis=3)                                              # (C, N, V, B+1)
    out = jnp.einsum('cnvb,cnbk->cnvk', lhs, mul, precision='highest')
    out = jnp.concatenate([mom, out], axis=3)
    new_mom = out[..., -1:]
    out = out[..., :-1]
    matrix = jax.nn.softmax(learnable_matrix, axis=1)
    matrix_1 = 2 * (matrix[:, N + 1:, :] - matrix[:, :N, :][:, ::-1, :])
    matrix_2 = 2 * jnp.sum(matrix[:, :N, :], axis=1, keepdims=True) + matrix[:, N:N + 1, :]
    v = (jnp.transpose((matrix_1[..., None] * out).sum(axis=1), (0, 2, 1))
         + matrix_2 * vector)
    return jnp.transpose(v, (1, 0, 2)), new_mom


# --------------------------------------------------------------------------- #
# Tests
# --------------------------------------------------------------------------- #
def _run_case(B, C, V, momentum_params, case_idx, use_flag):
    N = len(momentum_params)
    key = jax.random.fold_in(jax.random.PRNGKey(0), case_idx)
    kx1, kx2, kp, klm = jax.random.split(key, 4)

    # deterministic parameter construction (mirrors __init__) + small random
    # perturbation so the softmax / momentum mixing path is non-degenerate
    mp = np.tile(np.asarray(momentum_params, np.float32)[None, :], (C, 1))
    params_learnable = jnp.asarray(np.log(mp / (1.0 - mp)).astype(np.float32))
    params_learnable = params_learnable + 0.1 * jax.random.normal(kp, (C, N), jnp.float32)

    lm = np.zeros((C, 2 * N + 1, V), np.float32)
    for idx in range(2 * N + 1):
        lm[:, idx, :] = -((N - idx) ** 2) / 4.0
    learnable_matrix = (jnp.asarray(lm)
                        + 0.1 * jax.random.normal(klm, (C, 2 * N + 1, V), jnp.float32))

    xa = jax.random.normal(kx1, (B, C, V), jnp.float32)
    xb = jax.random.normal(kx2, (B, C, V), jnp.float32)

    # step 1: zero state -> initialised from xa[0];  step 2: carries the state
    mom0 = jnp.zeros((C, N, V), jnp.float32)
    if use_flag:   # caller-maintained flag path (skips the all-zero HBM scan)
        y1, mom1 = momentum_forward(xa, mom0, params_learnable, learnable_matrix,
                                    initialized=False)
        y2, mom2 = momentum_forward(xb, mom1, params_learnable, learnable_matrix,
                                    initialized=True)
    else:          # torch-identical auto-detect path
        y1, mom1 = momentum_forward(xa, mom0, params_learnable, learnable_matrix)
        y2, mom2 = momentum_forward(xb, mom1, params_learnable, learnable_matrix)
    jax.block_until_ready((y1, mom1, y2, mom2))

    pl4 = params_learnable.reshape(C, N, 1, 1)
    r1, rmom1 = reference_forward(xa, jnp.zeros((C, N, V, 1), jnp.float32), pl4, learnable_matrix)
    r2, rmom2 = reference_forward(xb, rmom1, pl4, learnable_matrix)

    np.testing.assert_allclose(np.asarray(y1), np.asarray(r1), rtol=1e-4, atol=1e-4)
    np.testing.assert_allclose(np.asarray(mom1), np.asarray(rmom1[..., 0]), rtol=1e-4, atol=1e-4)
    np.testing.assert_allclose(np.asarray(y2), np.asarray(r2), rtol=1e-4, atol=1e-4)
    np.testing.assert_allclose(np.asarray(mom2), np.asarray(rmom2[..., 0]), rtol=1e-4, atol=1e-4)


if __name__ == "__main__":
    # case 1: tiny config (V=16 exercises the lane-padding path, auto init flag)
    _run_case(B=8, C=4, V=16, momentum_params=[0.1, 0.5, 0.9], case_idx=0, use_flag=False)
    # case 2: lane-aligned multi-step path (grid of 4 parallel channel blocks,
    #         caller-maintained initialised flag, state alias)
    _run_case(B=8, C=8, V=128, momentum_params=[0.1, 0.5, 0.9], case_idx=1, use_flag=True)
    print("KERNEL_OK")
</pallas_src>

<mosaic_0001>
module attributes {stable_mosaic.version = 11 : i64} {
  func.func @momentum_kernel(%arg0: i32, %arg1: memref<8x128xf32, #tpu.memory_space<vmem>>, %arg2: memref<1x3x128xf32, #tpu.memory_space<vmem>>, %arg3: memref<1x27x8xf32, #tpu.memory_space<vmem>>, %arg4: memref<1x8x3xf32, #tpu.memory_space<vmem>>, %arg5: memref<1x3x1xf32, #tpu.memory_space<vmem>>, %arg6: memref<1x3x128xf32, #tpu.memory_space<vmem>>, %arg7: memref<1x128xf32, #tpu.memory_space<vmem>>, %arg8: memref<1x1xf32, #tpu.memory_space<smem>>, %arg9: memref<8x128xf32, #tpu.memory_space<vmem>>, %arg10: memref<1x3x128xf32, #tpu.memory_space<vmem>>) attributes {dimension_semantics = [#tpu.dimension_semantics<parallel>], iteration_bounds = array<i64: 4>, scalar_prefetch = 0 : i64, scratch_operands = 0 : i64, tpu.core_type = #tpu.core_type<tc>, window_params = [{transform_indices = @transform_0, window_bounds = array<i64: 8, 128>}, {transform_indices = @transform_1, window_bounds = array<i64: 1, 3, 128>}, {transform_indices = @transform_2, window_bounds = array<i64: 1, 27, 8>}, {transform_indices = @transform_3, window_bounds = array<i64: 1, 8, 3>}, {transform_indices = @transform_4, window_bounds = array<i64: 1, 3, 1>}, {transform_indices = @transform_5, window_bounds = array<i64: 1, 3, 128>}, {transform_indices = @transform_6, window_bounds = array<i64: 1, 128>}, {transform_indices = @transform_7, window_bounds = array<i64: 1, 1>}, {transform_indices = @transform_8, window_bounds = array<i64: 8, 128>}, {transform_indices = @transform_9, window_bounds = array<i64: 1, 3, 128>}]} {
    %c0 = arith.constant 0 : index
    %c0_0 = arith.constant 0 : index
    %0 = memref.load %arg8[%c0, %c0_0] : memref<1x1xf32, #tpu.memory_space<smem>>
    %c0_1 = arith.constant 0 : index
    %c0_2 = arith.constant 0 : index
    %1 = vector.load %arg1[%c0_1, %c0_2] : memref<8x128xf32, #tpu.memory_space<vmem>>, vector<8x128xf32>
    %2 = vector.shape_cast %1 : vector<8x128xf32> to vector<8x1x128xf32>
    %3 = tpu.transpose %2, [1, 0, 2] : vector<8x1x128xf32> -> vector<1x8x128xf32>
    %4 = vector.extract_strided_slice %3 {offsets = [0, 0, 0], sizes = [1, 1, 128], strides = [1, 1, 1]} : vector<1x8x128xf32> to vector<1x1x128xf32>
    %5 = vector.shape_cast %4 : vector<1x1x128xf32> to vector<1x1x128xf32>
    %6 = vector.broadcast %5 : vector<1x1x128xf32> to vector<1x3x128xf32>
    %7 = vector.broadcast %0 : f32 to vector<1x3x128xf32>
    %8 = arith.mulf %7, %6 : vector<1x3x128xf32>
    %cst = arith.constant 1.000000e+00 : f32
    %9 = arith.subf %cst, %0 : f32
    %c0_3 = arith.constant 0 : index
    %c0_4 = arith.constant 0 : index
    %c0_5 = arith.constant 0 : index
    %10 = vector.load %arg2[%c0_3, %c0_4, %c0_5] : memref<1x3x128xf32, #tpu.memory_space<vmem>>, vector<1x3x128xf32>
    %11 = vector.broadcast %9 : f32 to vector<1x3x128xf32>
    %12 = arith.mulf %11, %10 : vector<1x3x128xf32>
    %13 = arith.addf %8, %12 : vector<1x3x128xf32>
    %c0_6 = arith.constant 0 : index
    %c0_7 = arith.constant 0 : index
    %c0_8 = arith.constant 0 : index
    %14 = vector.load %arg3[%c0_6, %c0_7, %c0_8] : memref<1x27x8xf32, #tpu.memory_space<vmem>>, vector<1x27x8xf32>
    "tpu.trace_start"() <{level = 10 : i32, message = "crk,ckv->crv"}> : () -> ()
    %cst_9 = arith.constant dense<0.000000e+00> : vector<1x27x128xf32>
    %15 = tpu.matmul %14, %3, %cst_9 {dimension_numbers = #tpu.dot_dimension_numbers<[2], [1], [1], [2], [0, 0, 0, 1, 1, 2], [0], [0]>, precision = #tpu.contract_precision<fp32>} : vector<1x27x8xf32>, vector<1x8x128xf32>, vector<1x27x128xf32> -> vector<1x27x128xf32>
    "tpu.trace_stop"() : () -> ()
    %16 = vector.extract_strided_slice %15 {offsets = [0, 0, 0], sizes = [1, 24, 128], strides = [1, 1, 1]} : vector<1x27x128xf32> to vector<1x24x128xf32>
    %17 = vector.shape_cast %16 : vector<1x24x128xf32> to vector<1x3x8x128xf32>
    %18 = vector.extract_strided_slice %15 {offsets = [0, 24, 0], sizes = [1, 3, 128], strides = [1, 1, 1]} : vector<1x27x128xf32> to vector<1x3x128xf32>
    %c0_10 = arith.constant 0 : index
    %c0_11 = arith.constant 0 : index
    %c0_12 = arith.constant 0 : index
    %19 = vector.load %arg6[%c0_10, %c0_11, %c0_12] : memref<1x3x128xf32, #tpu.memory_space<vmem>>, vector<1x3x128xf32>
    %c0_13 = arith.constant 0 : index
    %c0_14 = arith.constant 0 : index
    %c0_15 = arith.constant 0 : index
    %20 = vector.load %arg4[%c0_13, %c0_14, %c0_15] : memref<1x8x3xf32, #tpu.memory_space<vmem>>, vector<1x8x3xf32>
    %21 = arith.mulf %19, %13 : vector<1x3x128xf32>
    "tpu.trace_start"() <{level = 10 : i32, message = "crn,cnv->crv"}> : () -> ()
    %cst_16 = arith.constant dense<0.000000e+00> : vector<1x8x128xf32>
    %22 = tpu.matmul %20, %21, %cst_16 {dimension_numbers = #tpu.dot_dimension_numbers<[2], [1], [1], [2], [0, 0, 0, 1, 1, 2], [0], [0]>, precision = #tpu.contract_precision<fp32>} : vector<1x8x3xf32>, vector<1x3x128xf32>, vector<1x8x128xf32> -> vector<1x8x128xf32>
    "tpu.trace_stop"() : () -> ()
    %23 = vector.shape_cast %19 : vector<1x3x128xf32> to vector<1x3x1x128xf32>
    %24 = vector.broadcast %23 : vector<1x3x1x128xf32> to vector<1x3x8x128xf32>
    %25 = arith.mulf %24, %17 : vector<1x3x8x128xf32>
    %cst_17 = arith.constant dense<0.000000e+00> : vector<1x8x128xf32>
    %26 = vector.multi_reduction <add>, %25, %cst_17 [1] : vector<1x3x8x128xf32> to vector<1x8x128xf32>
    %27 = arith.addf %26, %22 : vector<1x8x128xf32>
    %28 = tpu.transpose %27, [1, 0, 2] : vector<1x8x128xf32> -> vector<8x1x128xf32>
    %29 = vector.shape_cast %28 : vector<8x1x128xf32> to vector<8x128xf32>
    %c0_18 = arith.constant 0 : index
    %c0_19 = arith.constant 0 : index
    %30 = vector.load %arg7[%c0_18, %c0_19] : memref<1x128xf32, #tpu.memory_space<vmem>>, vector<1x128xf32>
    %31 = vector.broadcast %30 : vector<1x128xf32> to vector<8x128xf32>
    %32 = arith.mulf %31, %1 : vector<8x128xf32>
    %33 = arith.addf %29, %32 : vector<8x128xf32>
    %c0_20 = arith.constant 0 : index
    %c0_21 = arith.constant 0 : index
    %34 = vector.load %arg9[%c0_20, %c0_21] : memref<8x128xf32, #tpu.memory_space<vmem>>, vector<8x128xf32>
    tpu.vector_store %arg9[%c0_20, %c0_21], %33 {strides = array<i32>} : memref<8x128xf32, #tpu.memory_space<vmem>>, vector<8x128xf32>,
    %c0_22 = arith.constant 0 : index
    %c0_23 = arith.constant 0 : index
    %c0_24 = arith.constant 0 : index
    %35 = vector.load %arg5[%c0_22, %c0_23, %c0_24] : memref<1x3x1xf32, #tpu.memory_space<vmem>>, vector<1x3x1xf32>
    %36 = vector.broadcast %35 : vector<1x3x1xf32> to vector<1x3x128xf32>
    %37 = arith.mulf %36, %13 : vector<1x3x128xf32>
    %38 = arith.addf %18, %37 : vector<1x3x128xf32>
    %c0_25 = arith.constant 0 : index
    %c0_26 = arith.constant 0 : index
    %c0_27 = arith.constant 0 : index
    %39 = vector.load %arg10[%c0_25, %c0_26, %c0_27] : memref<1x3x128xf32, #tpu.memory_space<vmem>>, vector<1x3x128xf32>
    tpu.vector_store %arg10[%c0_25, %c0_26, %c0_27], %38 {strides = array<i32>} : memref<1x3x128xf32, #tpu.memory_space<vmem>>, vector<1x3x128xf32>,
    return
  }
  func.func @transform_0(%arg0: i32) -> (i32, i32) {
    %c0_i32 = arith.constant 0 : i32
    %c0_i32_0 = arith.constant 0 : i32
    return %c0_i32, %arg0 : i32, i32
  }
  func.func @transform_1(%arg0: i32) -> (i32, i32, i32) {
    %c0_i32 = arith.constant 0 : i32
    %c0_i32_0 = arith.constant 0 : i32
    %c0_i32_1 = arith.constant 0 : i32
    return %arg0, %c0_i32, %c0_i32_0 : i32, i32, i32
  }
  func.func @transform_2(%arg0: i32) -> (i32, i32, i32) {
    %c0_i32 = arith.constant 0 : i32
    %c0_i32_0 = arith.constant 0 : i32
    %c0_i32_1 = arith.constant 0 : i32
    return %arg0, %c0_i32, %c0_i32_0 : i32, i32, i32
  }
  func.func @transform_3(%arg0: i32) -> (i32, i32, i32) {
    %c0_i32 = arith.constant 0 : i32
    %c0_i32_0 = arith.constant 0 : i32
    %c0_i32_1 = arith.constant 0 : i32
    return %arg0, %c0_i32, %c0_i32_0 : i32, i32, i32
  }
  func.func @transform_4(%arg0: i32) -> (i32, i32, i32) {
    %c0_i32 = arith.constant 0 : i32
    %c0_i32_0 = arith.constant 0 : i32
    %c0_i32_1 = arith.constant 0 : i32
    return %arg0, %c0_i32, %c0_i32_0 : i32, i32, i32
  }
  func.func @transform_5(%arg0: i32) -> (i32, i32, i32) {
    %c0_i32 = arith.constant 0 : i32
    %c0_i32_0 = arith.constant 0 : i32
    %c0_i32_1 = arith.constant 0 : i32
    return %arg0, %c0_i32, %c0_i32_0 : i32, i32, i32
  }
  func.func @transform_6(%arg0: i32) -> (i32, i32) {
    %c0_i32 = arith.constant 0 : i32
    %c0_i32_0 = arith.constant 0 : i32
    return %c0_i32, %arg0 : i32, i32
  }
  func.func @transform_7(%arg0: i32) -> (i32, i32) {
    %c0_i32 = arith.constant 0 : i32
    %c0_i32_0 = arith.constant 0 : i32
    %c0_i32_1 = arith.constant 0 : i32
    return %c0_i32, %c0_i32_0 : i32, i32
  }
  func.func @transform_8(%arg0: i32) -> (i32, i32) {
    %c0_i32 = arith.constant 0 : i32
    %c0_i32_0 = arith.constant 0 : i32
    return %c0_i32, %arg0 : i32, i32
  }
  func.func @transform_9(%arg0: i32) -> (i32, i32, i32) {
    %c0_i32 = arith.constant 0 : i32
    %c0_i32_0 = arith.constant 0 : i32
    %c0_i32_1 = arith.constant 0 : i32
    return %arg0, %c0_i32, %c0_i32_0 : i32, i32, i32
  }
}

</mosaic_0001>

<llo_original>
// kernel: momentum_forward.1
$region0: #{momentum_forward.1}
  #allocation0 [shape = 'u32[]', space=smem, size = 0x4, offset = 0x4, fixed_abs, tag = 'smem constant byte address 0x4 - core index']
  #allocation1 [shape = 'u32[144,128]{1,0:T(1,128)}', space=vmem, size = 0x12000, scoped, tag = 'internal scratch']
  #allocation2 [shape = 'f32[1,1]{1,0:T(1,128)S(6)}', space=smem, size = 0x200, scoped, tag = 'scoped memory for momentum_forward.1']
  %s0 = inlined_call_operand.vmem [shape: f32[8,512], index: 0, kind: input, shape index: {}]
  %s1 = inlined_call_operand.vmem [shape: f32[4,3,128], index: 1, kind: input, shape index: {}, may-alias: {1,9}]
  %s2 = inlined_call_operand.vmem [shape: f32[4,27,8], index: 2, kind: input, shape index: {}]
  %s3 = inlined_call_operand.vmem [shape: f32[4,8,3], index: 3, kind: input, shape index: {}]
  %s4 = inlined_call_operand.vmem [shape: f32[4,3,1], index: 4, kind: input, shape index: {}]
  %s5 = inlined_call_operand.vmem [shape: f32[4,3,128], index: 5, kind: input, shape index: {}]
  %s6 = inlined_call_operand.vmem [shape: f32[1,512], index: 6, kind: input, shape index: {}]
  %s7 = inlined_call_operand.<no memory space> [shape: f32[1,1], index: 7, kind: input, shape index: {}]
  %s8 = inlined_call_operand.vmem [shape: f32[8,512], index: 8, kind: output, shape index: {0}]
  %s9 = inlined_call_operand.vmem [shape: f32[4,3,128], index: 9, kind: output, shape index: {1}, may-alias: {1,9}]
  %10 = xla_tuple %s8, %s9
  %s11 = sld [smem:[#allocation0]]
  $region73: #{momentum_forward.1} parent=0
    _
  %s13 = ssub.s32 1, %s11
  %s14 = scalar_select 0, %s13, %s11
  %15 = sst [smem:[#allocation2]] %s7
  loop: start=0, step=1, limit=6
  $region2: #{momentum_forward.1} parent=0 // loop_pre_header
    _
  $region3: #{momentum_forward.1} parent=0 // loop_header
    %s17 = sphi 0, %s21
    %p18 = scmp.ge.s32.totalorder %s17, 6
    %s27 = sphi 0, %s29
    %s30 = sphi 0, %s27
    %s31 = sphi 0, %s30
    %s47 = sphi 0, %s31
    %s53 = sphi 0, %s55
    %s56 = sphi 0, %s53
    %s57 = sphi 0, %s56
    %s73 = sphi 0, %s57
    %s79 = sphi 0, %s81
    %s82 = sphi 0, %s79
    %s83 = sphi 0, %s82
    %s99 = sphi 0, %s83
    %s105 = sphi 0, %s107
    %s108 = sphi 0, %s105
    %s109 = sphi 0, %s108
    %s125 = sphi 0, %s109
    %s131 = sphi 0, %s133
    %s134 = sphi 0, %s131
    %s135 = sphi 0, %s134
    %s151 = sphi 0, %s135
    %s157 = sphi 0, %s159
    %s160 = sphi 0, %s157
    %s161 = sphi 0, %s160
    %s177 = sphi 0, %s161
    %s183 = sphi 0, %s185
    %s186 = sphi 0, %s183
    %s187 = sphi 0, %s186
    %s203 = sphi 0, %s187
    %s207 = sphi 0, %s207
    %s209 = sphi 0, %s207
    %s210 = sphi 0, %s209
    %s224 = sphi 0, %s210
    %s230 = sphi 0, %s232
    %s233 = sphi 0, %s230
    %s234 = sphi 0, %s233
    %s250 = sphi 0, %s234
    %s256 = sphi 0, %s258
    %s259 = sphi 0, %s256
    %s260 = sphi 0, %s259
    %s276 = sphi 0, %s260
  $region4: #{momentum_forward.1} parent=0 // loop_header_branch
    %20 = sbr.rel (%p18) target = $region8
  $region5: #{momentum_forward.1} parent=0 // loop_body
    %s22 = ssub.s32 %s17, 1
    %s23 = ssub.s32 %s17, 2
    %s24 = sadd.s32 %s17, 1
    %s25 = ssub.s32 %s17, %s24
    %p26 = scmp.eq.s32.totalorder %s25, 0
    %s28 = sadd.s32 %s27, 1
    %s29 = scalar_select %p26, %s27, %s28
    %p32 = pneg %p26
    %p33 = scmp.eq.s32.totalorder %s17, 3
    %p34 = por %p32, %p33
    %p35 = scmp.ne.s32.totalorder %s27, %s30
    %p36 = scmp.eq.s32.totalorder %s17, 0
    %p37 = por %p35, %p36
    %p38 = scmp.ne.s32.totalorder %s27, %s30
    %p39 = scmp.eq.s32.totalorder %s22, 3
    %p40 = por %p38, %p39
    %p41 = scmp.ne.s32.totalorder %s30, %s31
    %p42 = scmp.eq.s32.totalorder %s22, 0
    %p43 = por %p41, %p42
    %p44 = scmp.ne.s32.totalorder %s30, %s31
    %p45 = scmp.eq.s32.totalorder %s23, 3
    %p46 = por %p44, %p45
    %p48 = scmp.ne.s32.totalorder %s31, %s47
    %p49 = scmp.eq.s32.totalorder %s23, 0
    %p50 = por %p48, %p49
    %s51 = ssub.s32 %s17, %s24
    %p52 = scmp.eq.s32.totalorder %s51, 0
    %s54 = sadd.s32 %s53, 1
    %s55 = scalar_select %p52, %s53, %s54
    %p58 = pneg %p52
    %p59 = scmp.eq.s32.totalorder %s17, 3
    %p60 = por %p58, %p59
    %p61 = scmp.ne.s32.totalorder %s53, %s56
    %p62 = scmp.eq.s32.totalorder %s17, 0
    %p63 = por %p61, %p62
    %p64 = scmp.ne.s32.totalorder %s53, %s56
    %p65 = scmp.eq.s32.totalorder %s22, 3
    %p66 = por %p64, %p65
    %p67 = scmp.ne.s32.totalorder %s56, %s57
    %p68 = scmp.eq.s32.totalorder %s22, 0
    %p69 = por %p67, %p68
    %p70 = scmp.ne.s32.totalorder %s56, %s57
    %p71 = scmp.eq.s32.totalorder %s23, 3
    %p72 = por %p70, %p71
    %p74 = scmp.ne.s32.totalorder %s57, %s73
    %p75 = scmp.eq.s32.totalorder %s23, 0
    %p76 = por %p74, %p75
    %s77 = ssub.s32 %s17, %s24
    %p78 = scmp.eq.s32.totalorder %s77, 0
    %s80 = sadd.s32 %s79, 1
    %s81 = scalar_select %p78, %s79, %s80
    %p84 = pneg %p78
    %p85 = scmp.eq.s32.totalorder %s17, 3
    %p86 = por %p84, %p85
    %p87 = scmp.ne.s32.totalorder %s79, %s82
    %p88 = scmp.eq.s32.totalorder %s17, 0
    %p89 = por %p87, %p88
    %p90 = scmp.ne.s32.totalorder %s79, %s82
    %p91 = scmp.eq.s32.totalorder %s22, 3
    %p92 = por %p90, %p91
    %p93 = scmp.ne.s32.totalorder %s82, %s83
    %p94 = scmp.eq.s32.totalorder %s22, 0
    %p95 = por %p93, %p94
    %p96 = scmp.ne.s32.totalorder %s82, %s83
    %p97 = scmp.eq.s32.totalorder %s23, 3
    %p98 = por %p96, %p97
    %p100 = scmp.ne.s32.totalorder %s83, %s99
    %p101 = scmp.eq.s32.totalorder %s23, 0
    %p102 = por %p100, %p101
    %s103 = ssub.s32 %s17, %s24
    %p104 = scmp.eq.s32.totalorder %s103, 0
    %s106 = sadd.s32 %s105, 1
    %s107 = scalar_select %p104, %s105, %s106
    %p110 = pneg %p104
    %p111 = scmp.eq.s32.totalorder %s17, 3
    %p112 = por %p110, %p111
    %p113 = scmp.ne.s32.totalorder %s105, %s108
    %p114 = scmp.eq.s32.totalorder %s17, 0
    %p115 = por %p113, %p114
    %p116 = scmp.ne.s32.totalorder %s105, %s108
    %p117 = scmp.eq.s32.totalorder %s22, 3
    %p118 = por %p116, %p117
    %p119 = scmp.ne.s32.totalorder %s108, %s109
    %p120 = scmp.eq.s32.totalorder %s22, 0
    %p121 = por %p119, %p120
    %p122 = scmp.ne.s32.totalorder %s108, %s109
    %p123 = scmp.eq.s32.totalorder %s23, 3
    %p124 = por %p122, %p123
    %p126 = scmp.ne.s32.totalorder %s109, %s125
    %p127 = scmp.eq.s32.totalorder %s23, 0
    %p128 = por %p126, %p127
    %s129 = ssub.s32 %s17, %s24
    %p130 = scmp.eq.s32.totalorder %s129, 0
    %s132 = sadd.s32 %s131, 1
    %s133 = scalar_select %p130, %s131, %s132
    %p136 = pneg %p130
    %p137 = scmp.eq.s32.totalorder %s17, 3
    %p138 = por %p136, %p137
    %p139 = scmp.ne.s32.totalorder %s131, %s134
    %p140 = scmp.eq.s32.totalorder %s17, 0
    %p141 = por %p139, %p140
    %p142 = scmp.ne.s32.totalorder %s131, %s134
    %p143 = scmp.eq.s32.totalorder %s22, 3
    %p144 = por %p142, %p143
    %p145 = scmp.ne.s32.totalorder %s134, %s135
    %p146 = scmp.eq.s32.totalorder %s22, 0
    %p147 = por %p145, %p146
    %p148 = scmp.ne.s32.totalorder %s134, %s135
    %p149 = scmp.eq.s32.totalorder %s23, 3
    %p150 = por %p148, %p149
    %p152 = scmp.ne.s32.totalorder %s135, %s151
    %p153 = scmp.eq.s32.totalorder %s23, 0
    %p154 = por %p152, %p153
    %s155 = ssub.s32 %s17, %s24
    %p156 = scmp.eq.s32.totalorder %s155, 0
    %s158 = sadd.s32 %s157, 1
    %s159 = scalar_select %p156, %s157, %s158
    %p162 = pneg %p156
    %p163 = scmp.eq.s32.totalorder %s17, 3
    %p164 = por %p162, %p163
    %p165 = scmp.ne.s32.totalorder %s157, %s160
    %p166 = scmp.eq.s32.totalorder %s17, 0
    %p167 = por %p165, %p166
    %p168 = scmp.ne.s32.totalorder %s157, %s160
    %p169 = scmp.eq.s32.totalorder %s22, 3
    %p170 = por %p168, %p169
    %p171 = scmp.ne.s32.totalorder %s160, %s161
    %p172 = scmp.eq.s32.totalorder %s22, 0
    %p173 = por %p171, %p172
    %p174 = scmp.ne.s32.totalorder %s160, %s161
    %p175 = scmp.eq.s32.totalorder %s23, 3
    %p176 = por %p174, %p175
    %p178 = scmp.ne.s32.totalorder %s161, %s177
    %p179 = scmp.eq.s32.totalorder %s23, 0
    %p180 = por %p178, %p179
    %s181 = ssub.s32 %s17, %s24
    %p182 = scmp.eq.s32.totalorder %s181, 0
    %s184 = sadd.s32 %s183, 1
    %s185 = scalar_select %p182, %s183, %s184
    %p188 = pneg %p182
    %p189 = scmp.eq.s32.totalorder %s17, 3
    %p190 = por %p188, %p189
    %p191 = scmp.ne.s32.totalorder %s183, %s186
    %p192 = scmp.eq.s32.totalorder %s17, 0
    %p193 = por %p191, %p192
    %p194 = scmp.ne.s32.totalorder %s183, %s186
    %p195 = scmp.eq.s32.totalorder %s22, 3
    %p196 = por %p194, %p195
    %p197 = scmp.ne.s32.totalorder %s186, %s187
    %p198 = scmp.eq.s32.totalorder %s22, 0
    %p199 = por %p197, %p198
    %p200 = scmp.ne.s32.totalorder %s186, %s187
    %p201 = scmp.eq.s32.totalorder %s23, 3
    %p202 = por %p200, %p201
    %p204 = scmp.ne.s32.totalorder %s187, %s203
    %p205 = scmp.eq.s32.totalorder %s23, 0
    %p206 = por %p204, %p205
    %s208 = sadd.s32 %s207, 1
    %p211 = scmp.eq.s32.totalorder %s17, 3
    %p212 = scmp.ne.s32.totalorder %s207, %s209
    %p213 = scmp.eq.s32.totalorder %s17, 0
    %p214 = por %p212, %p213
    %p215 = scmp.ne.s32.totalorder %s207, %s209
    %p216 = scmp.eq.s32.totalorder %s22, 3
    %p217 = por %p215, %p216
    %p218 = scmp.ne.s32.totalorder %s209, %s210
    %p219 = scmp.eq.s32.totalorder %s22, 0
    %p220 = por %p218, %p219
    %p221 = scmp.ne.s32.totalorder %s209, %s210
    %p222 = scmp.eq.s32.totalorder %s23, 3
    %p223 = por %p221, %p222
    %p225 = scmp.ne.s32.totalorder %s210, %s224
    %p226 = scmp.eq.s32.totalorder %s23, 0
    %p227 = por %p225, %p226
    %s228 = ssub.s32 %s17, %s24
    %p229 = scmp.eq.s32.totalorder %s228, 0
    %s231 = sadd.s32 %s230, 1
    %s232 = scalar_select %p229, %s230, %s231
    %p235 = pneg %p229
    %p236 = scmp.eq.s32.totalorder %s17, 3
    %p237 = por %p235, %p236
    %p238 = scmp.ne.s32.totalorder %s230, %s233
    %p239 = scmp.eq.s32.totalorder %s17, 0
    %p240 = por %p238, %p239
    %p241 = scmp.ne.s32.totalorder %s230, %s233
    %p242 = scmp.eq.s32.totalorder %s22, 3
    %p243 = por %p241, %p242
    %p244 = scmp.ne.s32.totalorder %s233, %s234
    %p245 = scmp.eq.s32.totalorder %s22, 0
    %p246 = por %p244, %p245
    %p247 = scmp.ne.s32.totalorder %s233, %s234
    %p248 = scmp.eq.s32.totalorder %s23, 3
    %p249 = por %p247, %p248
    %p251 = scmp.ne.s32.totalorder %s234, %s250
    %p252 = scmp.eq.s32.totalorder %s23, 0
    %p253 = por %p251, %p252
    %s254 = ssub.s32 %s17, %s24
    %p255 = scmp.eq.s32.totalorder %s254, 0
    %s257 = sadd.s32 %s256, 1
    %s258 = scalar_select %p255, %s256, %s257
    %p261 = pneg %p255
    %p262 = scmp.eq.s32.totalorder %s17, 3
    %p263 = por %p261, %p262
    %p264 = scmp.ne.s32.totalorder %s256, %s259
    %p265 = scmp.eq.s32.totalorder %s17, 0
    %p266 = por %p264, %p265
    %p267 = scmp.ne.s32.totalorder %s256, %s259
    %p268 = scmp.eq.s32.totalorder %s22, 3
    %p269 = por %p267, %p268
    %p270 = scmp.ne.s32.totalorder %s259, %s260
    %p271 = scmp.eq.s32.totalorder %s22, 0
    %p272 = por %p270, %p271
    %p273 = scmp.ne.s32.totalorder %s259, %s260
    %p274 = scmp.eq.s32.totalorder %s23, 3
    %p275 = por %p273, %p274
    %p277 = scmp.ne.s32.totalorder %s260, %s276
    %p278 = scmp.eq.s32.totalorder %s23, 0
    %p279 = por %p277, %p278
    %p280 = scmp.le.s32.totalorder 1, %s17
    %p281 = scmp.lt.s32.totalorder %s17, 5
    %p282 = pnand %p280, %p281
    %p283 = pneg %p282
    // Predicated region
    $region9: #{momentum_forward.1} parent=5 // pred_check
      _
    $region10: #{momentum_forward.1} parent=5 // pred_check_branch
      %285 = sbr.rel (%p282) target = $region12
    $region11: #{momentum_forward.1} parent=5 // pred_region
      %s286 = ssub.s32 %s17, 1
      // Predicated region
      $region13: #{momentum_forward.1} parent=11 // pred_check
        %p287 = pneg %p220
      $region14: #{momentum_forward.1} parent=11 // pred_check_branch
        %289 = sbr.rel (%p287) target = $region16
      $region15: #{momentum_forward.1} parent=11 // pred_region
        _
      $region16: #{momentum_forward.1} parent=11 // pred_fallthru
        _
    $region12: #{momentum_forward.1} parent=5 // pred_fallthru
      _
    %p290 = scmp.lt.s32.totalorder %s17, 4
    // Predicated region
    $region17: #{momentum_forward.1} parent=5 // pred_check
      %p291 = pneg %p290
    $region18: #{momentum_forward.1} parent=5 // pred_check_branch
      %293 = sbr.rel (%p291) target = $region20
    $region19: #{momentum_forward.1} parent=5 // pred_region
      // Predicated region
      $region21: #{momentum_forward.1} parent=19 // pred_check
        %p294 = pneg %p37
      $region22: #{momentum_forward.1} parent=19 // pred_check_branch
        %296 = sbr.rel (%p294) target = $region24
      $region23: #{momentum_forward.1} parent=19 // pred_region
        %p297 = scmp.lt.s32.totalorder %s17, 3
        %s298 = scalar_select %p297, %s17, 3
        %s299 = smul.addr %s298, 8
        %s300 = scalar_lea.vmem %s0, %s299
      $region24: #{momentum_forward.1} parent=19 // pred_fallthru
        _
      // Predicated region
      $region25: #{momentum_forward.1} parent=19 // pred_check
        %p301 = pneg %p63
      $region26: #{momentum_forward.1} parent=19 // pred_check_branch
        %303 = sbr.rel (%p301) target = $region28
      $region27: #{momentum_forward.1} parent=19 // pred_region
        %p304 = scmp.lt.s32.totalorder %s17, 3
        %s305 = scalar_select %p304, %s17, 3
        %s306 = smul.addr %s305, 4
        %s307 = scalar_lea.vmem %s1, %s306
      $region28: #{momentum_forward.1} parent=19 // pred_fallthru
        _
      // Predicated region
      $region29: #{momentum_forward.1} parent=19 // pred_check
        %p308 = pneg %p89
      $region30: #{momentum_forward.1} parent=19 // pred_check_branch
        %310 = sbr.rel (%p308) target = $region32
      $region31: #{momentum_forward.1} parent=19 // pred_region
        %p311 = scmp.lt.s32.totalorder %s17, 3
        %s312 = scalar_select %p311, %s17, 3
        %s313 = smul.addr %s312, 4
        %s314 = smul.addr %s313, 8
        %s315 = scalar_lea.vmem %s2, %s314
      $region32: #{momentum_forward.1} parent=19 // pred_fallthru
        _
      // Predicated region
      $region33: #{momentum_forward.1} parent=19 // pred_check
        %p316 = pneg %p115
      $region34: #{momentum_forward.1} parent=19 // pred_check_branch
        %318 = sbr.rel (%p316) target = $region36
      $region35: #{momentum_forward.1} parent=19 // pred_region
        %p319 = scmp.lt.s32.totalorder %s17, 3
        %s320 = scalar_select %p319, %s17, 3
        %s321 = smul.addr %s320, 8
        %s322 = scalar_lea.vmem %s3, %s321
      $region36: #{momentum_forward.1} parent=19 // pred_fallthru
        _
      // Predicated region
      $region37: #{momentum_forward.1} parent=19 // pred_check
        %p323 = pneg %p141
      $region38: #{momentum_forward.1} parent=19 // pred_check_branch
        %325 = sbr.rel (%p323) target = $region40
      $region39: #{momentum_forward.1} parent=19 // pred_region
        %p326 = scmp.lt.s32.totalorder %s17, 3
        %s327 = scalar_select %p326, %s17, 3
        %s328 = smul.addr %s327, 4
        %s329 = scalar_lea.vmem %s4, %s328
      $region40: #{momentum_forward.1} parent=19 // pred_fallthru
        _
      // Predicated region
      $region41: #{momentum_forward.1} parent=19 // pred_check
        %p330 = pneg %p167
      $region42: #{momentum_forward.1} parent=19 // pred_check_branch
        %332 = sbr.rel (%p330) target = $region44
      $region43: #{momentum_forward.1} parent=19 // pred_region
        %p333 = scmp.lt.s32.totalorder %s17, 3
        %s334 = scalar_select %p333, %s17, 3
        %s335 = smul.addr %s334, 4
        %s336 = scalar_lea.vmem %s5, %s335
      $region44: #{momentum_forward.1} parent=19 // pred_fallthru
        _
      // Predicated region
      $region45: #{momentum_forward.1} parent=19 // pred_check
        %p337 = pneg %p193
      $region46: #{momentum_forward.1} parent=19 // pred_check_branch
        %339 = sbr.rel (%p337) target = $region48
      $region47: #{momentum_forward.1} parent=19 // pred_region
        %p340 = scmp.lt.s32.totalorder %s17, 3
        %s341 = scalar_select %p340, %s17, 3
        %s342 = scalar_lea.vmem %s6, %s341
      $region48: #{momentum_forward.1} parent=19 // pred_fallthru
        _
    $region20: #{momentum_forward.1} parent=5 // pred_fallthru
      _
    %p343 = scmp.le.s32.totalorder 1, %s17
    %p344 = scmp.lt.s32.totalorder %s17, 5
    %p345 = pnand %p343, %p344
    %p346 = pneg %p345
    // Predicated region
    $region49: #{momentum_forward.1} parent=5 // pred_check
      _
    $region50: #{momentum_forward.1} parent=5 // pred_check_branch
      %348 = sbr.rel (%p345) target = $region52
    $region51: #{momentum_forward.1} parent=5 // pred_region
      %s349 = ssub.s32 %s17, 1
      %p350 = scmp.lt.s32.totalorder %s22, 3
      %s351 = scalar_select %p350, %s22, 3
      %s352 = smul.addr %s351, 8
      %s353 = scalar_lea.vmem %s0, %s352
      %p354 = pneg %p43
      %p355 = pneg %p40
      %p356 = scmp.lt.s32.totalorder %s22, 3
      %s357 = scalar_select %p356, %s22, 3
      %s358 = smul.addr %s357, 4
      %s359 = scalar_lea.vmem %s1, %s358
      %p360 = pneg %p69
      %p361 = pneg %p66
      %p362 = scmp.lt.s32.totalorder %s22, 3
      %s363 = scalar_select %p362, %s22, 3
      %s364 = smul.addr %s363, 4
      %s365 = smul.addr %s364, 8
      %s366 = scalar_lea.vmem %s2, %s365
      %p367 = pneg %p95
      %p368 = pneg %p92
      %p369 = scmp.lt.s32.totalorder %s22, 3
      %s370 = scalar_select %p369, %s22, 3
      %s371 = smul.addr %s370, 8
      %s372 = scalar_lea.vmem %s3, %s371
      %p373 = pneg %p121
      %p374 = pneg %p118
      %p375 = scmp.lt.s32.totalorder %s22, 3
      %s376 = scalar_select %p375, %s22, 3
      %s377 = smul.addr %s376, 4
      %s378 = scalar_lea.vmem %s4, %s377
      %p379 = pneg %p147
      %p380 = pneg %p144
      %p381 = scmp.lt.s32.totalorder %s22, 3
      %s382 = scalar_select %p381, %s22, 3
      %s383 = smul.addr %s382, 4
      %s384 = scalar_lea.vmem %s5, %s383
      %p385 = pneg %p173
      %p386 = pneg %p170
      %p387 = scmp.lt.s32.totalorder %s22, 3
      %s388 = scalar_select %p387, %s22, 3
      %s389 = scalar_lea.vmem %s6, %s388
      %p390 = pneg %p199
      %p391 = pneg %p196
      %p392 = pneg %p220
      %p393 = pneg %p217
      %p394 = pneg %p246
      %p395 = pneg %p243
      %p396 = scmp.lt.s32.totalorder %s22, 3
      %s397 = scalar_select %p396, %s22, 3
      %s398 = smul.addr %s397, 8
      %s399 = scalar_lea.vmem %s8, %s398
      %p400 = pneg %p272
      %p401 = pneg %p269
      %p402 = scmp.lt.s32.totalorder %s22, 3
      %s403 = scalar_select %p402, %s22, 3
      %s404 = smul.addr %s403, 4
      %s405 = scalar_lea.vmem %s9, %s404
      %p406 = scmp.lt.s32.totalorder %s22, 3
      %s407 = scalar_select %p406, %s22, 3
      %s408 = smul.addr %s407, 8
      %s409 = scalar_lea.vmem %s0, %s408
      %p410 = scmp.lt.s32.totalorder %s22, 3
      %s411 = scalar_select %p410, %s22, 3
      %s412 = smul.addr %s411, 4
      %s413 = scalar_lea.vmem %s1, %s412
      %p414 = scmp.lt.s32.totalorder %s22, 3
      %s415 = scalar_select %p414, %s22, 3
      %s416 = smul.addr %s415, 4
      %s417 = smul.addr %s416, 8
      %s418 = scalar_lea.vmem %s2, %s417
      %p419 = scmp.lt.s32.totalorder %s22, 3
      %s420 = scalar_select %p419, %s22, 3
      %s421 = smul.addr %s420, 8
      %s422 = scalar_lea.vmem %s3, %s421
      %p423 = scmp.lt.s32.totalorder %s22, 3
      %s424 = scalar_select %p423, %s22, 3
      %s425 = smul.addr %s424, 4
      %s426 = scalar_lea.vmem %s4, %s425
      %p427 = scmp.lt.s32.totalorder %s22, 3
      %s428 = scalar_select %p427, %s22, 3
      %s429 = smul.addr %s428, 4
      %s430 = scalar_lea.vmem %s5, %s429
      %p431 = scmp.lt.s32.totalorder %s22, 3
      %s432 = scalar_select %p431, %s22, 3
      %s433 = scalar_lea.vmem %s6, %s432
      %p434 = scmp.lt.s32.totalorder %s22, 3
      %s435 = scalar_select %p434, %s22, 3
      %s436 = smul.addr %s435, 8
      %s437 = scalar_lea.vmem %s8, %s436
      %p438 = scmp.lt.s32.totalorder %s22, 3
      %s439 = scalar_select %p438, %s22, 3
      %s440 = smul.addr %s439, 4
      %s441 = scalar_lea.vmem %s9, %s440
      %s442 = sld [smem:[#allocation2]]
      %v443 = vld [vmem:[%s409] sm:$0xff]
      %v445 = vcombine.high %v443, %v443
      %v447 = vunpack.c.l.s4 1966171168
      %v448 = vunpack.c.0.s8 %v447
      %v449 = vlaneseq
      %v450 = vshrl.u32 %v449, 7
      %v451 = vsub.s32 %v448, %v450
      %v452 = vrot.slane %v443, %v451
      %v454 = vunpack.c.l.s4 1966171168
      %v455 = vunpack.c.0.s8 %v454
      %v456 = vlaneseq
      %v457 = vshrl.u32 %v456, 7
      %v458 = vsub.s32 %v455, %v457
      %v459 = vrot.slane %v445, %v458
      %v460 = vcombine.high %v452, %v452
      %v461 = vcombine.high %v459, %v459
      %v463 = vunpack.c.l.s4 1966171168
      %v464 = vunpack.c.0.s8 %v463
      %v465 = vlaneseq
      %v466 = vshrl.u32 %v465, 7
      %v467 = vsub.s32 %v464, %v466
      %v468 = vrot.slane %v452, %v467
      %v470 = vunpack.c.l.s4 1966171168
      %v471 = vunpack.c.0.s8 %v470
      %v472 = vlaneseq
      %v473 = vshrl.u32 %v472, 7
      %v474 = vsub.s32 %v471, %v473
      %v475 = vrot.slane %v459, %v474
      %v477 = vunpack.c.l.s4 1966171168
      %v478 = vunpack.c.0.s8 %v477
      %v479 = vlaneseq
      %v480 = vshrl.u32 %v479, 7
      %v481 = vsub.s32 %v478, %v480
      %v482 = vrot.slane %v460, %v481
      %v484 = vunpack.c.l.s4 1966171168
      %v485 = vunpack.c.0.s8 %v484
      %v486 = vlaneseq
      %v487 = vshrl.u32 %v486, 7
      %v488 = vsub.s32 %v485, %v487
      %v489 = vrot.slane %v461, %v488
      %v490 = vcombine.high %v468, %v468
      %v491 = vcombine.high %v475, %v475
      %v492 = vcombine.high %v482, %v482
      %v493 = vcombine.high %v489, %v489
      %v494 = vlaneseq
      %v495 = vshrl.u32 %v494, 7
      %v496 = vsub.s32 0, %v495
      %v497 = vrot.slane %v468, %v496
      %v499 = vstv %s442
      %v500 = vmul.f32 %v499, %v497
      %s501 = ssub.f32 1.0, %s442
      %v502 = vld [vmem:[%s413] sm:$0x7]
      %v503 = vstv %s501
      %v504 = vmul.f32 %v503, %v502
      %v505 = vadd.f32 %v500, %v504
      %v506 = vld [vmem:[%s418] sm:$0xff]
      %v507 = vld [vmem:[%s418 + $0x8] sm:$0xff]
      %v508 = vld [vmem:[%s418 + $0x10] sm:$0xff]
      %v509 = vld [vmem:[%s418 + $0x18] sm:$0x7]
      %v510 = vcombine.low %v468, %v482
      %v511 = vcombine.low %v490, %v492
      %v512 = vcombine.low %v475, %v489
      %v513 = vcombine.low %v491, %v493
      %v515 = vunpack.c.l.s4 1966171168
      %v516 = vunpack.c.0.s8 %v515
      %v517 = vlaneseq
      %v518 = vshrl.u32 %v517, 7
      %v519 = vsub.s32 %v516, %v518
      %v520 = vrot.slane %v510, %v519
      %v522 = vunpack.c.l.s4 1966171168
      %v523 = vunpack.c.0.s8 %v522
      %v524 = vlaneseq
      %v525 = vshrl.u32 %v524, 7
      %v526 = vsub.s32 %v523, %v525
      %v527 = vrot.slane %v511, %v526
      %v529 = vunpack.c.l.s4 1966171168
      %v530 = vunpack.c.0.s8 %v529
      %v531 = vlaneseq
      %v532 = vshrl.u32 %v531, 7
      %v533 = vsub.s32 %v530, %v532
      %v534 = vrot.slane %v512, %v533
      %v536 = vunpack.c.l.s4 1966171168
      %v537 = vunpack.c.0.s8 %v536
      %v538 = vlaneseq
      %v539 = vshrl.u32 %v538, 7
      %v540 = vsub.s32 %v537, %v539
      %v541 = vrot.slane %v513, %v540
      %v542 = vcombine.low %v520, %v527
      %v543 = vcombine.low %v534, %v541
      %v545 = vunpack.c.l.s4 1966171168
      %v546 = vunpack.c.0.s8 %v545
      %v547 = vlaneseq
      %v548 = vshrl.u32 %v547, 7
      %v549 = vsub.s32 %v546, %v548
      %v550 = vrot.slane %v542, %v549
      %v552 = vunpack.c.l.s4 1966171168
      %v553 = vunpack.c.0.s8 %v552
      %v554 = vlaneseq
      %v555 = vshrl.u32 %v554, 7
      %v556 = vsub.s32 %v553, %v555
      %v557 = vrot.slane %v543, %v556
      %v558 = vcombine.low %v550, %v557
      %vm560 = vcmask 64512
      %v562 = vsel %vm560, %v506, 0
      %v565 = vsel %vm560, %v507, 0
      %v568 = vsel %vm560, %v508, 0
      %v571 = vsel %vm560, %v509, 0
      %573 = vmatprep.subr.mxu0 0.0
      %v574 = vand.u32 %v558, 4294901760
      %575 = vmatpush1.msra.mxu0 %v574
      %576 = vmatprep.subr.mxu0 0.0
      %577 = vmatpush1.msra.mxu0 0.0
      %578 = vmatprep.subr.mxu0 0.0
      %579 = vmatpush1.msra.mxu0 0.0
      %580 = vmatprep.subr.mxu0 0.0
      %581 = vmatpush1.msra.mxu0 0.0
      %582 = vmatprep.subr.mxu0 0.0
      %583 = vmatpush1.msra.mxu0 0.0
      %584 = vmatprep.subr.mxu0 0.0
      %585 = vmatpush1.msra.mxu0 0.0
      %586 = vmatprep.subr.mxu0 0.0
      %587 = vmatpush1.msra.mxu0 0.0
      %588 = vmatprep.subr.mxu0 0.0
      %589 = vmatpush1.msra.mxu0 0.0
      %590 = vmatprep.subr.mxu0 0.0
      %591 = vmatpush1.msra.mxu0 0.0
      %592 = vmatprep.subr.mxu0 0.0
      %593 = vmatpush1.msra.mxu0 0.0
      %594 = vmatprep.subr.mxu0 0.0
      %595 = vmatpush1.msra.mxu0 0.0
      %596 = vmatprep.subr.mxu0 0.0
      %597 = vmatpush1.msra.mxu0 0.0
      %598 = vmatprep.subr.mxu0 0.0
      %599 = vmatpush1.msra.mxu0 0.0
      %600 = vmatprep.subr.mxu0 0.0
      %601 = vmatpush1.msra.mxu0 0.0
      %602 = vmatprep.subr.mxu0 0.0
      %603 = vmatpush1.msra.mxu0 0.0
      %604 = vmatprep.subr.mxu0 0.0
      %605 = vmatpush1.msra.mxu0 0.0
      %606 = vmatprep.subr.mxu0 0.0
      %607 = vmatpush1.msra.mxu0 0.0
      %608 = vmatprep.subr.mxu0 0.0
      %609 = vmatpush1.msra.mxu0 0.0
      %610 = vmatprep.subr.mxu0 0.0
      %611 = vmatpush1.msra.mxu0 0.0
      %612 = vmatprep.subr.mxu0 0.0
      %613 = vmatpush1.msra.mxu0 0.0
      %614 = vmatprep.subr.mxu0 0.0
      %615 = vmatpush1.msra.mxu0 0.0
      %616 = vmatprep.subr.mxu0 0.0
      %617 = vmatpush1.msra.mxu0 0.0
      %618 = vmatprep.subr.mxu0 0.0
      %619 = vmatpush1.msra.mxu0 0.0
      %620 = vmatprep.subr.mxu0 0.0
      %621 = vmatpush1.msra.mxu0 0.0
      %622 = vmatprep.subr.mxu0 0.0
      %623 = vmatpush1.msra.mxu0 0.0
      %624 = vmatprep.subr.mxu0 0.0
      %625 = vmatpush1.msra.mxu0 0.0
      %626 = vmatprep.subr.mxu0 0.0
      %627 = vmatpush1.msra.mxu0 0.0
      %628 = vmatprep.subr.mxu0 0.0
      %629 = vmatpush1.msra.mxu0 0.0
      %630 = vmatprep.subr.mxu0 0.0
      %631 = vmatpush1.msra.mxu0 0.0
      %632 = vmatprep.subr.mxu0 0.0
      %633 = vmatpush1.msra.mxu0 0.0
      %634 = vmatprep.subr.mxu0 0.0
      %635 = vmatpush1.msra.mxu0 0.0
      %636 = vmatprep.subr.mxu0 0.0
      %637 = vmatpush1.msra.mxu0 0.0
      %638 = vmatprep.mubr.f32.mxu0 0.0
      %v639 = vand.u32 %v562, 4294901760
      %v640 = vsub.f32 %v562, %v639
      %v641 = vand.u32 %v640, 4294901760
      %v642 = vsub.f32 %v640, %v641
      %v643 = vand.u32 %v642, 4294901760
      %644 = vmatmul.mubr.f32.gmra.mrb[0].mxu0 %v643
      %v645 = vpop.f32.mrb[0].mxu0
      %v646 = vadd.f32 0.0, %v645
      %v647 = vpop.f32.mrb[0].mxu0
      %648 = vmatprep.mubr.f32.mxu0 0.0
      %v649 = vand.u32 %v565, 4294901760
      %v650 = vsub.f32 %v565, %v649
      %v651 = vand.u32 %v650, 4294901760
      %v652 = vsub.f32 %v650, %v651
      %v653 = vand.u32 %v652, 4294901760
      %654 = vmatmul.mubr.f32.gmra.mrb[0].mxu0 %v653
      %v655 = vpop.f32.mrb[0].mxu0
      %v656 = vadd.f32 0.0, %v655
      %v657 = vpop.f32.mrb[0].mxu0
      %658 = vmatprep.mubr.f32.mxu0 0.0
      %v659 = vand.u32 %v568, 4294901760
      %v660 = vsub.f32 %v568, %v659
      %v661 = vand.u32 %v660, 4294901760
      %v662 = vsub.f32 %v660, %v661
      %v663 = vand.u32 %v662, 4294901760
      %664 = vmatmul.mubr.f32.gmra.mrb[0].mxu0 %v663
      %v665 = vpop.f32.mrb[0].mxu0
      %v666 = vadd.f32 0.0, %v665
      %v667 = vpop.f32.mrb[0].mxu0
      %668 = vmatprep.mubr.f32.mxu0 0.0
      %v669 = vand.u32 %v571, 4294901760
      %v670 = vsub.f32 %v571, %v669
      %v671 = vand.u32 %v670, 4294901760
      %v672 = vsub.f32 %v670, %v671
      %v673 = vand.u32 %v672, 4294901760
      %674 = vmatmul.mubr.f32.gmra.mrb[0].mxu0 %v673
      %v675 = vpop.f32.mrb[0].mxu0
      %v676 = vadd.f32 0.0, %v675
      %v677 = vpop.f32.mrb[0].mxu0
      %678 = vdwg.mxu0
      %679 = vmatprep.subr.mxu0 0.0
      %v680 = vand.u32 %v558, 4294901760
      %v681 = vsub.f32 %v558, %v680
      %v682 = vand.u32 %v681, 4294901760
      %v683 = vsub.f32 %v681, %v682
      %v684 = vand.u32 %v683, 4294901760
      %685 = vmatpush1.msra.mxu0 %v684
      %686 = vmatprep.subr.mxu0 0.0
      %687 = vmatpush1.msra.mxu0 0.0
      %688 = vmatprep.subr.mxu0 0.0
      %689 = vmatpush1.msra.mxu0 0.0
      %690 = vmatprep.subr.mxu0 0.0
      %691 = vmatpush1.msra.mxu0 0.0
      %692 = vmatprep.subr.mxu0 0.0
      %693 = vmatpush1.msra.mxu0 0.0
      %694 = vmatprep.subr.mxu0 0.0
      %695 = vmatpush1.msra.mxu0 0.0
      %696 = vmatprep.subr.mxu0 0.0
      %697 = vmatpush1.msra.mxu0 0.0
      %698 = vmatprep.subr.mxu0 0.0
      %699 = vmatpush1.msra.mxu0 0.0
      %700 = vmatprep.subr.mxu0 0.0
      %701 = vmatpush1.msra.mxu0 0.0
      %702 = vmatprep.subr.mxu0 0.0
      %703 = vmatpush1.msra.mxu0 0.0
      %704 = vmatprep.subr.mxu0 0.0
      %705 = vmatpush1.msra.mxu0 0.0
      %706 = vmatprep.subr.mxu0 0.0
      %707 = vmatpush1.msra.mxu0 0.0
      %708 = vmatprep.subr.mxu0 0.0
      %709 = vmatpush1.msra.mxu0 0.0
      %710 = vmatprep.subr.mxu0 0.0
      %711 = vmatpush1.msra.mxu0 0.0
      %712 = vmatprep.subr.mxu0 0.0
      %713 = vmatpush1.msra.mxu0 0.0
      %714 = vmatprep.subr.mxu0 0.0
      %715 = vmatpush1.msra.mxu0 0.0
      %716 = vmatprep.subr.mxu0 0.0
      %717 = vmatpush1.msra.mxu0 0.0
      %718 = vmatprep.subr.mxu0 0.0
      %719 = vmatpush1.msra.mxu0 0.0
      %720 = vmatprep.subr.mxu0 0.0
      %721 = vmatpush1.msra.mxu0 0.0
      %722 = vmatprep.subr.mxu0 0.0
      %723 = vmatpush1.msra.mxu0 0.0
      %724 = vmatprep.subr.mxu0 0.0
      %725 = vmatpush1.msra.mxu0 0.0
      %726 = vmatprep.subr.mxu0 0.0
      %727 = vmatpush1.msra.mxu0 0.0
      %728 = vmatprep.subr.mxu0 0.0
      %729 = vmatpush1.msra.mxu0 0.0
      %730 = vmatprep.subr.mxu0 0.0
      %731 = vmatpush1.msra.mxu0 0.0
      %732 = vmatprep.subr.mxu0 0.0
      %733 = vmatpush1.msra.mxu0 0.0
      %734 = vmatprep.subr.mxu0 0.0
      %735 = vmatpush1.msra.mxu0 0.0
      %736 = vmatprep.subr.mxu0 0.0
      %737 = vmatpush1.msra.mxu0 0.0
      %738 = vmatprep.subr.mxu0 0.0
      %739 = vmatpush1.msra.mxu0 0.0
      %740 = vmatprep.subr.mxu0 0.0
      %741 = vmatpush1.msra.mxu0 0.0
      %742 = vmatprep.subr.mxu0 0.0
      %743 = vmatpush1.msra.mxu0 0.0
      %744 = vmatprep.subr.mxu0 0.0
      %745 = vmatpush1.msra.mxu0 0.0
      %746 = vmatprep.subr.mxu0 0.0
      %747 = vmatpush1.msra.mxu0 0.0
      %748 = vmatprep.mubr.f32.mxu0 0.0
      %v749 = vand.u32 %v562, 4294901760
      %750 = vmatmul.mubr.f32.gmra.mrb[0].mxu0 %v749
      %v751 = vpop.f32.mrb[0].mxu0
      %v752 = vadd.f32 %v646, %v751
      %v753 = vpop.f32.mrb[0].mxu0
      %754 = vmatprep.mubr.f32.mxu0 0.0
      %v755 = vand.u32 %v565, 4294901760
      %756 = vmatmul.mubr.f32.gmra.mrb[0].mxu0 %v755
      %v757 = vpop.f32.mrb[0].mxu0
      %v758 = vadd.f32 %v656, %v757
      %v759 = vpop.f32.mrb[0].mxu0
      %760 = vmatprep.mubr.f32.mxu0 0.0
      %v761 = vand.u32 %v568, 4294901760
      %762 = vmatmul.mubr.f32.gmra.mrb[0].mxu0 %v761
      %v763 = vpop.f32.mrb[0].mxu0
      %v764 = vadd.f32 %v666, %v763
      %v765 = vpop.f32.mrb[0].mxu0
      %766 = vmatprep.mubr.f32.mxu0 0.0
      %v767 = vand.u32 %v571, 4294901760
      %768 = vmatmul.mubr.f32.gmra.mrb[0].mxu0 %v767
      %v769 = vpop.f32.mrb[0].mxu0
      %v770 = vadd.f32 %v676, %v769
      %v771 = vpop.f32.mrb[0].mxu0
      %772 = vdwg.mxu0
      %773 = vmatprep.subr.mxu0 0.0
      %v774 = vand.u32 %v558, 4294901760
      %v775 = vsub.f32 %v558, %v774
      %776 = vmatpush1.msra.mxu0 %v775
      %777 = vmatprep.subr.mxu0 0.0
      %778 = vmatpush1.msra.mxu0 0.0
      %779 = vmatprep.subr.mxu0 0.0
      %780 = vmatpush1.msra.mxu0 0.0
      %781 = vmatprep.subr.mxu0 0.0
      %782 = vmatpush1.msra.mxu0 0.0
      %783 = vmatprep.subr.mxu0 0.0
      %784 = vmatpush1.msra.mxu0 0.0
      %785 = vmatprep.subr.mxu0 0.0
      %786 = vmatpush1.msra.mxu0 0.0
      %787 = vmatprep.subr.mxu0 0.0
      %788 = vmatpush1.msra.mxu0 0.0
      %789 = vmatprep.subr.mxu0 0.0
      %790 = vmatpush1.msra.mxu0 0.0
      %791 = vmatprep.subr.mxu0 0.0
      %792 = vmatpush1.msra.mxu0 0.0
      %793 = vmatprep.subr.mxu0 0.0
      %794 = vmatpush1.msra.mxu0 0.0
      %795 = vmatprep.subr.mxu0 0.0
      %796 = vmatpush1.msra.mxu0 0.0
      %797 = vmatprep.subr.mxu0 0.0
      %798 = vmatpush1.msra.mxu0 0.0
      %799 = vmatprep.subr.mxu0 0.0
      %800 = vmatpush1.msra.mxu0 0.0
      %801 = vmatprep.subr.mxu0 0.0
      %802 = vmatpush1.msra.mxu0 0.0
      %803 = vmatprep.subr.mxu0 0.0
      %804 = vmatpush1.msra.mxu0 0.0
      %805 = vmatprep.subr.mxu0 0.0
      %806 = vmatpush1.msra.mxu0 0.0
      %807 = vmatprep.subr.mxu0 0.0
      %808 = vmatpush1.msra.mxu0 0.0
      %809 = vmatprep.subr.mxu0 0.0
      %810 = vmatpush1.msra.mxu0 0.0
      %811 = vmatprep.subr.mxu0 0.0
      %812 = vmatpush1.msra.mxu0 0.0
      %813 = vmatprep.subr.mxu0 0.0
      %814 = vmatpush1.msra.mxu0 0.0
      %815 = vmatprep.subr.mxu0 0.0
      %816 = vmatpush1.msra.mxu0 0.0
      %817 = vmatprep.subr.mxu0 0.0
      %818 = vmatpush1.msra.mxu0 0.0
      %819 = vmatprep.subr.mxu0 0.0
      %820 = vmatpush1.msra.mxu0 0.0
      %821 = vmatprep.subr.mxu0 0.0
      %822 = vmatpush1.msra.mxu0 0.0
      %823 = vmatprep.subr.mxu0 0.0
      %824 = vmatpush1.msra.mxu0 0.0
      %825 = vmatprep.subr.mxu0 0.0
      %826 = vmatpush1.msra.mxu0 0.0
      %827 = vmatprep.subr.mxu0 0.0
      %828 = vmatpush1.msra.mxu0 0.0
      %829 = vmatprep.subr.mxu0 0.0
      %830 = vmatpush1.msra.mxu0 0.0
      %831 = vmatprep.subr.mxu0 0.0
      %832 = vmatpush1.msra.mxu0 0.0
      %833 = vmatprep.subr.mxu0 0.0
      %834 = vmatpush1.msra.mxu0 0.0
      %835 = vmatprep.subr.mxu0 0.0
      %836 = vmatpush1.msra.mxu0 0.0
      %837 = vmatprep.subr.mxu0 0.0
      %838 = vmatpush1.msra.mxu0 0.0
      %839 = vmatprep.mubr.f32.mxu0 0.0
      %v840 = vand.u32 %v562, 4294901760
      %v841 = vsub.f32 %v562, %v840
      %842 = vmatmul.mubr.f32.gmra.mrb[0].mxu0 %v841
      %v843 = vpop.f32.mrb[0].mxu0
      %v844 = vadd.f32 %v752, %v843
      %v845 = vpop.f32.mrb[0].mxu0
      %846 = vmatprep.mubr.f32.mxu0 0.0
      %v847 = vand.u32 %v565, 4294901760
      %v848 = vsub.f32 %v565, %v847
      %849 = vmatmul.mubr.f32.gmra.mrb[0].mxu0 %v848
      %v850 = vpop.f32.mrb[0].mxu0
      %v851 = vadd.f32 %v758, %v850
      %v852 = vpop.f32.mrb[0].mxu0
      %853 = vmatprep.mubr.f32.mxu0 0.0
      %v854 = vand.u32 %v568, 4294901760
      %v855 = vsub.f32 %v568, %v854
      %856 = vmatmul.mubr.f32.gmra.mrb[0].mxu0 %v855
      %v857 = vpop.f32.mrb[0].mxu0
      %v858 = vadd.f32 %v764, %v857
      %v859 = vpop.f32.mrb[0].mxu0
      %860 = vmatprep.mubr.f32.mxu0 0.0
      %v861 = vand.u32 %v571, 4294901760
      %v862 = vsub.f32 %v571, %v861
      %863 = vmatmul.mubr.f32.gmra.mrb[0].mxu0 %v862
      %v864 = vpop.f32.mrb[0].mxu0
      %v865 = vadd.f32 %v770, %v864
      %v866 = vpop.f32.mrb[0].mxu0
      %867 = vdwg.mxu0
      %868 = vmatprep.subr.mxu0 0.0
      %v869 = vand.u32 %v558, 4294901760
      %870 = vmatpush1.msra.mxu0 %v869
      %871 = vmatprep.subr.mxu0 0.0
      %872 = vmatpush1.msra.mxu0 0.0
      %873 = vmatprep.subr.mxu0 0.0
      %874 = vmatpush1.msra.mxu0 0.0
      %875 = vmatprep.subr.mxu0 0.0
      %876 = vmatpush1.msra.mxu0 0.0
      %877 = vmatprep.subr.mxu0 0.0
      %878 = vmatpush1.msra.mxu0 0.0
      %879 = vmatprep.subr.mxu0 0.0
      %880 = vmatpush1.msra.mxu0 0.0
      %881 = vmatprep.subr.mxu0 0.0
      %882 = vmatpush1.msra.mxu0 0.0
      %883 = vmatprep.subr.mxu0 0.0
      %884 = vmatpush1.msra.mxu0 0.0
      %885 = vmatprep.subr.mxu0 0.0
      %886 = vmatpush1.msra.mxu0 0.0
      %887 = vmatprep.subr.mxu0 0.0
      %888 = vmatpush1.msra.mxu0 0.0
      %889 = vmatprep.subr.mxu0 0.0
      %890 = vmatpush1.msra.mxu0 0.0
      %891 = vmatprep.subr.mxu0 0.0
      %892 = vmatpush1.msra.mxu0 0.0
      %893 = vmatprep.subr.mxu0 0.0
      %894 = vmatpush1.msra.mxu0 0.0
      %895 = vmatprep.subr.mxu0 0.0
      %896 = vmatpush1.msra.mxu0 0.0
      %897 = vmatprep.subr.mxu0 0.0
      %898 = vmatpush1.msra.mxu0 0.0
      %899 = vmatprep.subr.mxu0 0.0
      %900 = vmatpush1.msra.mxu0 0.0
      %901 = vmatprep.subr.mxu0 0.0
      %902 = vmatpush1.msra.mxu0 0.0
      %903 = vmatprep.subr.mxu0 0.0
      %904 = vmatpush1.msra.mxu0 0.0
      %905 = vmatprep.subr.mxu0 0.0
      %906 = vmatpush1.msra.mxu0 0.0
      %907 = vmatprep.subr.mxu0 0.0
      %908 = vmatpush1.msra.mxu0 0.0
      %909 = vmatprep.subr.mxu0 0.0
      %910 = vmatpush1.msra.mxu0 0.0
      %911 = vmatprep.subr.mxu0 0.0
      %912 = vmatpush1.msra.mxu0 0.0
      %913 = vmatprep.subr.mxu0 0.0
      %914 = vmatpush1.msra.mxu0 0.0
      %915 = vmatprep.subr.mxu0 0.0
      %916 = vmatpush1.msra.mxu0 0.0
      %917 = vmatprep.subr.mxu0 0.0
      %918 = vmatpush1.msra.mxu0 0.0
      %919 = vmatprep.subr.mxu0 0.0
      %920 = vmatpush1.msra.mxu0 0.0
      %921 = vmatprep.subr.mxu0 0.0
      %922 = vmatpush1.msra.mxu0 0.0
      %923 = vmatprep.subr.mxu0 0.0
      %924 = vmatpush1.msra.mxu0 0.0
      %925 = vmatprep.subr.mxu0 0.0
      %926 = vmatpush1.msra.mxu0 0.0
      %927 = vmatprep.subr.mxu0 0.0
      %928 = vmatpush1.msra.mxu0 0.0
      %929 = vmatprep.subr.mxu0 0.0
      %930 = vmatpush1.msra.mxu0 0.0
      %931 = vmatprep.subr.mxu0 0.0
      %932 = vmatpush1.msra.mxu0 0.0
      %933 = vmatprep.mubr.f32.mxu0 0.0
      %v934 = vand.u32 %v562, 4294901760
      %v935 = vsub.f32 %v562, %v934
      %v936 = vand.u32 %v935, 4294901760
      %937 = vmatmul.mubr.f32.gmra.mrb[0].mxu0 %v936
      %v938 = vpop.f32.mrb[0].mxu0
      %v939 = vadd.f32 %v844, %v938
      %v940 = vpop.f32.mrb[0].mxu0
      %941 = vmatprep.mubr.f32.mxu0 0.0
      %v942 = vand.u32 %v565, 4294901760
      %v943 = vsub.f32 %v565, %v942
      %v944 = vand.u32 %v943, 4294901760
      %945 = vmatmul.mubr.f32.gmra.mrb[0].mxu0 %v944
      %v946 = vpop.f32.mrb[0].mxu0
      %v947 = vadd.f32 %v851, %v946
      %v948 = vpop.f32.mrb[0].mxu0
      %949 = vmatprep.mubr.f32.mxu0 0.0
      %v950 = vand.u32 %v568, 4294901760
      %v951 = vsub.f32 %v568, %v950
      %v952 = vand.u32 %v951, 4294901760
      %953 = vmatmul.mubr.f32.gmra.mrb[0].mxu0 %v952
      %v954 = vpop.f32.mrb[0].mxu0
      %v955 = vadd.f32 %v858, %v954
      %v956 = vpop.f32.mrb[0].mxu0
      %957 = vmatprep.mubr.f32.mxu0 0.0
      %v958 = vand.u32 %v571, 4294901760
      %v959 = vsub.f32 %v571, %v958
      %v960 = vand.u32 %v959, 4294901760
      %961 = vmatmul.mubr.f32.gmra.mrb[0].mxu0 %v960
      %v962 = vpop.f32.mrb[0].mxu0
      %v963 = vadd.f32 %v865, %v962
      %v964 = vpop.f32.mrb[0].mxu0
      %965 = vdwg.mxu0
      %966 = vmatprep.subr.mxu0 0.0
      %v967 = vand.u32 %v558, 4294901760
      %v968 = vsub.f32 %v558, %v967
      %v969 = vand.u32 %v968, 4294901760
      %970 = vmatpush1.msra.mxu0 %v969
      %971 = vmatprep.subr.mxu0 0.0
      %972 = vmatpush1.msra.mxu0 0.0
      %973 = vmatprep.subr.mxu0 0.0
      %974 = vmatpush1.msra.mxu0 0.0
      %975 = vmatprep.subr.mxu0 0.0
      %976 = vmatpush1.msra.mxu0 0.0
      %977 = vmatprep.subr.mxu0 0.0
      %978 = vmatpush1.msra.mxu0 0.0
      %979 = vmatprep.subr.mxu0 0.0
      %980 = vmatpush1.msra.mxu0 0.0
      %981 = vmatprep.subr.mxu0 0.0
      %982 = vmatpush1.msra.mxu0 0.0
      %983 = vmatprep.subr.mxu0 0.0
      %984 = vmatpush1.msra.mxu0 0.0
      %985 = vmatprep.subr.mxu0 0.0
      %986 = vmatpush1.msra.mxu0 0.0
      %987 = vmatprep.subr.mxu0 0.0
      %988 = vmatpush1.msra.mxu0 0.0
      %989 = vmatprep.subr.mxu0 0.0
      %990 = vmatpush1.msra.mxu0 0.0
      %991 = vmatprep.subr.mxu0 0.0
      %992 = vmatpush1.msra.mxu0 0.0
      %993 = vmatprep.subr.mxu0 0.0
      %994 = vmatpush1.msra.mxu0 0.0
      %995 = vmatprep.subr.mxu0 0.0
      %996 = vmatpush1.msra.mxu0 0.0
      %997 = vmatprep.subr.mxu0 0.0
      %998 = vmatpush1.msra.mxu0 0.0
      %999 = vmatprep.subr.mxu0 0.0
      %1000 = vmatpush1.msra.mxu0 0.0
      %1001 = vmatprep.subr.mxu0 0.0
      %1002 = vmatpush1.msra.mxu0 0.0
      %1003 = vmatprep.subr.mxu0 0.0
      %1004 = vmatpush1.msra.mxu0 0.0
      %1005 = vmatprep.subr.mxu0 0.0
      %1006 = vmatpush1.msra.mxu0 0.0
      %1007 = vmatprep.subr.mxu0 0.0
      %1008 = vmatpush1.msra.mxu0 0.0
      %1009 = vmatprep.subr.mxu0 0.0
      %1010 = vmatpush1.msra.mxu0 0.0
      %1011 = vmatprep.subr.mxu0 0.0
      %1012 = vmatpush1.msra.mxu0 0.0
      %1013 = vmatprep.subr.mxu0 0.0
      %1014 = vmatpush1.msra.mxu0 0.0
      %1015 = vmatprep.subr.mxu0 0.0
      %1016 = vmatpush1.msra.mxu0 0.0
      %1017 = vmatprep.subr.mxu0 0.0
      %1018 = vmatpush1.msra.mxu0 0.0
      %1019 = vmatprep.subr.mxu0 0.0
      %1020 = vmatpush1.msra.mxu0 0.0
      %1021 = vmatprep.subr.mxu0 0.0
      %1022 = vmatpush1.msra.mxu0 0.0
      %1023 = vmatprep.subr.mxu0 0.0
      %1024 = vmatpush1.msra.mxu0 0.0
      %1025 = vmatprep.subr.mxu0 0.0
      %1026 = vmatpush1.msra.mxu0 0.0
      %1027 = vmatprep.subr.mxu0 0.0
      %1028 = vmatpush1.msra.mxu0 0.0
      %1029 = vmatprep.subr.mxu0 0.0
      %1030 = vmatpush1.msra.mxu0 0.0
      %1031 = vmatprep.subr.mxu0 0.0
      %1032 = vmatpush1.msra.mxu0 0.0
      %1033 = vmatprep.mubr.f32.mxu0 0.0
      %v1034 = vand.u32 %v562, 4294901760
      %1035 = vmatmul.mubr.f32.gmra.mrb[0].mxu0 %v1034
      %v1036 = vpop.f32.mrb[0].mxu0
      %v1037 = vadd.f32 %v939, %v1036
      %v1038 = vpop.f32.mrb[0].mxu0
      %1039 = vmatprep.mubr.f32.mxu0 0.0
      %v1040 = vand.u32 %v565, 4294901760
      %1041 = vmatmul.mubr.f32.gmra.mrb[0].mxu0 %v1040
      %v1042 = vpop.f32.mrb[0].mxu0
      %v1043 = vadd.f32 %v947, %v1042
      %v1044 = vpop.f32.mrb[0].mxu0
      %1045 = vmatprep.mubr.f32.mxu0 0.0
      %v1046 = vand.u32 %v568, 4294901760
      %1047 = vmatmul.mubr.f32.gmra.mrb[0].mxu0 %v1046
      %v1048 = vpop.f32.mrb[0].mxu0
      %v1049 = vadd.f32 %v955, %v1048
      %v1050 = vpop.f32.mrb[0].mxu0
      %1051 = vmatprep.mubr.f32.mxu0 0.0
      %v1052 = vand.u32 %v571, 4294901760
      %1053 = vmatmul.mubr.f32.gmra.mrb[0].mxu0 %v1052
      %v1054 = vpop.f32.mrb[0].mxu0
      %v1055 = vadd.f32 %v963, %v1054
      %v1056 = vpop.f32.mrb[0].mxu0
      %1057 = vdwg.mxu0
      %1058 = vmatprep.subr.mxu0 0.0
      %v1059 = vand.u32 %v558, 4294901760
      %1060 = vmatpush1.msra.mxu0 %v1059
      %1061 = vmatprep.subr.mxu0 0.0
      %1062 = vmatpush1.msra.mxu0 0.0
      %1063 = vmatprep.subr.mxu0 0.0
      %1064 = vmatpush1.msra.mxu0 0.0
      %1065 = vmatprep.subr.mxu0 0.0
      %1066 = vmatpush1.msra.mxu0 0.0
      %1067 = vmatprep.subr.mxu0 0.0
      %1068 = vmatpush1.msra.mxu0 0.0
      %1069 = vmatprep.subr.mxu0 0.0
      %1070 = vmatpush1.msra.mxu0 0.0
      %1071 = vmatprep.subr.mxu0 0.0
      %1072 = vmatpush1.msra.mxu0 0.0
      %1073 = vmatprep.subr.mxu0 0.0
      %1074 = vmatpush1.msra.mxu0 0.0
      %1075 = vmatprep.subr.mxu0 0.0
      %1076 = vmatpush1.msra.mxu0 0.0
      %1077 = vmatprep.subr.mxu0 0.0
      %1078 = vmatpush1.msra.mxu0 0.0
      %1079 = vmatprep.subr.mxu0 0.0
      %1080 = vmatpush1.msra.mxu0 0.0
      %1081 = vmatprep.subr.mxu0 0.0
      %1082 = vmatpush1.msra.mxu0 0.0
      %1083 = vmatprep.subr.mxu0 0.0
      %1084 = vmatpush1.msra.mxu0 0.0
      %1085 = vmatprep.subr.mxu0 0.0
      %1086 = vmatpush1.msra.mxu0 0.0
      %1087 = vmatprep.subr.mxu0 0.0
      %1088 = vmatpush1.msra.mxu0 0.0
      %1089 = vmatprep.subr.mxu0 0.0
      %1090 = vmatpush1.msra.mxu0 0.0
      %1091 = vmatprep.subr.mxu0 0.0
      %1092 = vmatpush1.msra.mxu0 0.0
      %1093 = vmatprep.subr.mxu0 0.0
      %1094 = vmatpush1.msra.mxu0 0.0
      %1095 = vmatprep.subr.mxu0 0.0
      %1096 = vmatpush1.msra.mxu0 0.0
      %1097 = vmatprep.subr.mxu0 0.0
      %1098 = vmatpush1.msra.mxu0 0.0
      %1099 = vmatprep.subr.mxu0 0.0
      %1100 = vmatpush1.msra.mxu0 0.0
      %1101 = vmatprep.subr.mxu0 0.0
      %1102 = vmatpush1.msra.mxu0 0.0
      %1103 = vmatprep.subr.mxu0 0.0
      %1104 = vmatpush1.msra.mxu0 0.0
      %1105 = vmatprep.subr.mxu0 0.0
      %1106 = vmatpush1.msra.mxu0 0.0
      %1107 = vmatprep.subr.mxu0 0.0
      %1108 = vmatpush1.msra.mxu0 0.0
      %1109 = vmatprep.subr.mxu0 0.0
      %1110 = vmatpush1.msra.mxu0 0.0
      %1111 = vmatprep.subr.mxu0 0.0
      %1112 = vmatpush1.msra.mxu0 0.0
      %1113 = vmatprep.subr.mxu0 0.0
      %1114 = vmatpush1.msra.mxu0 0.0
      %1115 = vmatprep.subr.mxu0 0.0
      %1116 = vmatpush1.msra.mxu0 0.0
      %1117 = vmatprep.subr.mxu0 0.0
      %1118 = vmatpush1.msra.mxu0 0.0
      %1119 = vmatprep.subr.mxu0 0.0
      %1120 = vmatpush1.msra.mxu0 0.0
      %1121 = vmatprep.subr.mxu0 0.0
      %1122 = vmatpush1.msra.mxu0 0.0
      %1123 = vmatprep.mubr.f32.mxu0 0.0
      %v1124 = vand.u32 %v562, 4294901760
      %1125 = vmatmul.mubr.f32.gmra.mrb[0].mxu0 %v1124
      %v1126 = vpop.f32.mrb[0].mxu0
      %v1127 = vadd.f32 %v1037, %v1126
      %v1128 = vpop.f32.mrb[0].mxu0
      %1129 = vmatprep.mubr.f32.mxu0 0.0
      %v1130 = vand.u32 %v565, 4294901760
      %1131 = vmatmul.mubr.f32.gmra.mrb[0].mxu0 %v1130
      %v1132 = vpop.f32.mrb[0].mxu0
      %v1133 = vadd.f32 %v1043, %v1132
      %v1134 = vpop.f32.mrb[0].mxu0
      %1135 = vmatprep.mubr.f32.mxu0 0.0
      %v1136 = vand.u32 %v568, 4294901760
      %1137 = vmatmul.mubr.f32.gmra.mrb[0].mxu0 %v1136
      %v1138 = vpop.f32.mrb[0].mxu0
      %v1139 = vadd.f32 %v1049, %v1138
      %v1140 = vpop.f32.mrb[0].mxu0
      %1141 = vmatprep.mubr.f32.mxu0 0.0
      %v1142 = vand.u32 %v571, 4294901760
      %1143 = vmatmul.mubr.f32.gmra.mrb[0].mxu0 %v1142
      %v1144 = vpop.f32.mrb[0].mxu0
      %v1145 = vadd.f32 %v1055, %v1144
      %v1146 = vpop.f32.mrb[0].mxu0
      %1147 = vdwg.mxu0
      %v1148 = vld [vmem:[%s430] sm:$0x7]
      %v1149 = vld [vmem:[%s422] sm:$0xff]
      %v1150 = vmul.f32 %v1148, %v505
      %vm1151 = vcmask 23552
      %v1153 = vsel %vm1151, %v1149, 0
      %vm1155 = vcmask 1042432
      %v1157 = vsel %vm1155, %v1150, 0
      %1159 = vmatprep.subr.mxu0 0.0
      %v1160 = vand.u32 %v1157, 4294901760
      %1161 = vmatpush1.msra.mxu0 %v1160
      %1162 = vmatprep.subr.mxu0 0.0
      %1163 = vmatpush1.msra.mxu0 0.0
      %1164 = vmatprep.subr.mxu0 0.0
      %1165 = vmatpush1.msra.mxu0 0.0
      %1166 = vmatprep.subr.mxu0 0.0
      %1167 = vmatpush1.msra.mxu0 0.0
      %1168 = vmatprep.subr.mxu0 0.0
      %1169 = vmatpush1.msra.mxu0 0.0
      %1170 = vmatprep.subr.mxu0 0.0
      %1171 = vmatpush1.msra.mxu0 0.0
      %1172 = vmatprep.subr.mxu0 0.0
      %1173 = vmatpush1.msra.mxu0 0.0
      %1174 = vmatprep.subr.mxu0 0.0
      %1175 = vmatpush1.msra.mxu0 0.0
      %1176 = vmatprep.subr.mxu0 0.0
      %1177 = vmatpush1.msra.mxu0 0.0
      %1178 = vmatprep.subr.mxu0 0.0
      %1179 = vmatpush1.msra.mxu0 0.0
      %1180 = vmatprep.subr.mxu0 0.0
      %1181 = vmatpush1.msra.mxu0 0.0
      %1182 = vmatprep.subr.mxu0 0.0
      %1183 = vmatpush1.msra.mxu0 0.0
      %1184 = vmatprep.subr.mxu0 0.0
      %1185 = vmatpush1.msra.mxu0 0.0
      %1186 = vmatprep.subr.mxu0 0.0
      %1187 = vmatpush1.msra.mxu0 0.0
      %1188 = vmatprep.subr.mxu0 0.0
      %1189 = vmatpush1.msra.mxu0 0.0
      %1190 = vmatprep.subr.mxu0 0.0
      %1191 = vmatpush1.msra.mxu0 0.0
      %1192 = vmatprep.subr.mxu0 0.0
      %1193 = vmatpush1.msra.mxu0 0.0
      %1194 = vmatprep.subr.mxu0 0.0
      %1195 = vmatpush1.msra.mxu0 0.0
      %1196 = vmatprep.subr.mxu0 0.0
      %1197 = vmatpush1.msra.mxu0 0.0
      %1198 = vmatprep.subr.mxu0 0.0
      %1199 = vmatpush1.msra.mxu0 0.0
      %1200 = vmatprep.subr.mxu0 0.0
      %1201 = vmatpush1.msra.mxu0 0.0
      %1202 = vmatprep.subr.mxu0 0.0
      %1203 = vmatpush1.msra.mxu0 0.0
      %1204 = vmatprep.subr.mxu0 0.0
      %1205 = vmatpush1.msra.mxu0 0.0
      %1206 = vmatprep.subr.mxu0 0.0
      %1207 = vmatpush1.msra.mxu0 0.0
      %1208 = vmatprep.subr.mxu0 0.0
      %1209 = vmatpush1.msra.mxu0 0.0
      %1210 = vmatprep.subr.mxu0 0.0
      %1211 = vmatpush1.msra.mxu0 0.0
      %1212 = vmatprep.subr.mxu0 0.0
      %1213 = vmatpush1.msra.mxu0 0.0
      %1214 = vmatprep.subr.mxu0 0.0
      %1215 = vmatpush1.msra.mxu0 0.0
      %1216 = vmatprep.subr.mxu0 0.0
      %1217 = vmatpush1.msra.mxu0 0.0
      %1218 = vmatprep.subr.mxu0 0.0
      %1219 = vmatpush1.msra.mxu0 0.0
      %1220 = vmatprep.subr.mxu0 0.0
      %1221 = vmatpush1.msra.mxu0 0.0
      %1222 = vmatprep.subr.mxu0 0.0
      %1223 = vmatpush1.msra.mxu0 0.0
      %1224 = vmatprep.mubr.f32.mxu0 0.0
      %v1225 = vand.u32 %v1153, 4294901760
      %v1226 = vsub.f32 %v1153, %v1225
      %v1227 = vand.u32 %v1226, 4294901760
      %v1228 = vsub.f32 %v1226, %v1227
      %v1229 = vand.u32 %v1228, 4294901760
      %1230 = vmatmul.mubr.f32.gmra.mrb[0].mxu0 %v1229
      %v1231 = vpop.f32.mrb[0].mxu0
      %v1232 = vadd.f32 0.0, %v1231
      %v1233 = vpop.f32.mrb[0].mxu0
      %1234 = vdwg.mxu0
      %1235 = vmatprep.subr.mxu0 0.0
      %v1236 = vand.u32 %v1157, 4294901760
      %v1237 = vsub.f32 %v1157, %v1236
      %v1238 = vand.u32 %v1237, 4294901760
      %v1239 = vsub.f32 %v1237, %v1238
      %v1240 = vand.u32 %v1239, 4294901760
      %1241 = vmatpush1.msra.mxu0 %v1240
      %1242 = vmatprep.subr.mxu0 0.0
      %1243 = vmatpush1.msra.mxu0 0.0
      %1244 = vmatprep.subr.mxu0 0.0
      %1245 = vmatpush1.msra.mxu0 0.0
      %1246 = vmatprep.subr.mxu0 0.0
      %1247 = vmatpush1.msra.mxu0 0.0
      %1248 = vmatprep.subr.mxu0 0.0
      %1249 = vmatpush1.msra.mxu0 0.0
      %1250 = vmatprep.subr.mxu0 0.0
      %1251 = vmatpush1.msra.mxu0 0.0
      %1252 = vmatprep.subr.mxu0 0.0
      %1253 = vmatpush1.msra.mxu0 0.0
      %1254 = vmatprep.subr.mxu0 0.0
      %1255 = vmatpush1.msra.mxu0 0.0
      %1256 = vmatprep.subr.mxu0 0.0
      %1257 = vmatpush1.msra.mxu0 0.0
      %1258 = vmatprep.subr.mxu0 0.0
      %1259 = vmatpush1.msra.mxu0 0.0
      %1260 = vmatprep.subr.mxu0 0.0
      %1261 = vmatpush1.msra.mxu0 0.0
      %1262 = vmatprep.subr.mxu0 0.0
      %1263 = vmatpush1.msra.mxu0 0.0
      %1264 = vmatprep.subr.mxu0 0.0
      %1265 = vmatpush1.msra.mxu0 0.0
      %1266 = vmatprep.subr.mxu0 0.0
      %1267 = vmatpush1.msra.mxu0 0.0
      %1268 = vmatprep.subr.mxu0 0.0
      %1269 = vmatpush1.msra.mxu0 0.0
      %1270 = vmatprep.subr.mxu0 0.0
      %1271 = vmatpush1.msra.mxu0 0.0
      %1272 = vmatprep.subr.mxu0 0.0
      %1273 = vmatpush1.msra.mxu0 0.0
      %1274 = vmatprep.subr.mxu0 0.0
      %1275 = vmatpush1.msra.mxu0 0.0
      %1276 = vmatprep.subr.mxu0 0.0
      %1277 = vmatpush1.msra.mxu0 0.0
      %1278 = vmatprep.subr.mxu0 0.0
      %1279 = vmatpush1.msra.mxu0 0.0
      %1280 = vmatprep.subr.mxu0 0.0
      %1281 = vmatpush1.msra.mxu0 0.0
      %1282 = vmatprep.subr.mxu0 0.0
      %1283 = vmatpush1.msra.mxu0 0.0
      %1284 = vmatprep.subr.mxu0 0.0
      %1285 = vmatpush1.msra.mxu0 0.0
      %1286 = vmatprep.subr.mxu0 0.0
      %1287 = vmatpush1.msra.mxu0 0.0
      %1288 = vmatprep.subr.mxu0 0.0
      %1289 = vmatpush1.msra.mxu0 0.0
      %1290 = vmatprep.subr.mxu0 0.0
      %1291 = vmatpush1.msra.mxu0 0.0
      %1292 = vmatprep.subr.mxu0 0.0
      %1293 = vmatpush1.msra.mxu0 0.0
      %1294 = vmatprep.subr.mxu0 0.0
      %1295 = vmatpush1.msra.mxu0 0.0
      %1296 = vmatprep.subr.mxu0 0.0
      %1297 = vmatpush1.msra.mxu0 0.0
      %1298 = vmatprep.subr.mxu0 0.0
      %1299 = vmatpush1.msra.mxu0 0.0
      %1300 = vmatprep.subr.mxu0 0.0
      %1301 = vmatpush1.msra.mxu0 0.0
      %1302 = vmatprep.subr.mxu0 0.0
      %1303 = vmatpush1.msra.mxu0 0.0
      %1304 = vmatprep.mubr.f32.mxu0 0.0
      %v1305 = vand.u32 %v1153, 4294901760
      %1306 = vmatmul.mubr.f32.gmra.mrb[0].mxu0 %v1305
      %v1307 = vpop.f32.mrb[0].mxu0
      %v1308 = vadd.f32 %v1232, %v1307
      %v1309 = vpop.f32.mrb[0].mxu0
      %1310 = vdwg.mxu0
      %1311 = vmatprep.subr.mxu0 0.0
      %v1312 = vand.u32 %v1157, 4294901760
      %v1313 = vsub.f32 %v1157, %v1312
      %1314 = vmatpush1.msra.mxu0 %v1313
      %1315 = vmatprep.subr.mxu0 0.0
      %1316 = vmatpush1.msra.mxu0 0.0
      %1317 = vmatprep.subr.mxu0 0.0
      %1318 = vmatpush1.msra.mxu0 0.0
      %1319 = vmatprep.subr.mxu0 0.0
      %1320 = vmatpush1.msra.mxu0 0.0
      %1321 = vmatprep.subr.mxu0 0.0
      %1322 = vmatpush1.msra.mxu0 0.0
      %1323 = vmatprep.subr.mxu0 0.0
      %1324 = vmatpush1.msra.mxu0 0.0
      %1325 = vmatprep.subr.mxu0 0.0
      %1326 = vmatpush1.msra.mxu0 0.0
      %1327 = vmatprep.subr.mxu0 0.0
      %1328 = vmatpush1.msra.mxu0 0.0
      %1329 = vmatprep.subr.mxu0 0.0
      %1330 = vmatpush1.msra.mxu0 0.0
      %1331 = vmatprep.subr.mxu0 0.0
      %1332 = vmatpush1.msra.mxu0 0.0
      %1333 = vmatprep.subr.mxu0 0.0
      %1334 = vmatpush1.msra.mxu0 0.0
      %1335 = vmatprep.subr.mxu0 0.0
      %1336 = vmatpush1.msra.mxu0 0.0
      %1337 = vmatprep.subr.mxu0 0.0
      %1338 = vmatpush1.msra.mxu0 0.0
      %1339 = vmatprep.subr.mxu0 0.0
      %1340 = vmatpush1.msra.mxu0 0.0
      %1341 = vmatprep.subr.mxu0 0.0
      %1342 = vmatpush1.msra.mxu0 0.0
      %1343 = vmatprep.subr.mxu0 0.0
      %1344 = vmatpush1.msra.mxu0 0.0
      %1345 = vmatprep.subr.mxu0 0.0
      %1346 = vmatpush1.msra.mxu0 0.0
      %1347 = vmatprep.subr.mxu0 0.0
      %1348 = vmatpush1.msra.mxu0 0.0
      %1349 = vmatprep.subr.mxu0 0.0
      %1350 = vmatpush1.msra.mxu0 0.0
      %1351 = vmatprep.subr.mxu0 0.0
      %1352 = vmatpush1.msra.mxu0 0.0
      %1353 = vmatprep.subr.mxu0 0.0
      %1354 = vmatpush1.msra.mxu0 0.0
      %1355 = vmatprep.subr.mxu0 0.0
      %1356 = vmatpush1.msra.mxu0 0.0
      %1357 = vmatprep.subr.mxu0 0.0
      %1358 = vmatpush1.msra.mxu0 0.0
      %1359 = vmatprep.subr.mxu0 0.0
      %1360 = vmatpush1.msra.mxu0 0.0
      %1361 = vmatprep.subr.mxu0 0.0
      %1362 = vmatpush1.msra.mxu0 0.0
      %1363 = vmatprep.subr.mxu0 0.0
      %1364 = vmatpush1.msra.mxu0 0.0
      %1365 = vmatprep.subr.mxu0 0.0
      %1366 = vmatpush1.msra.mxu0 0.0
      %1367 = vmatprep.subr.mxu0 0.0
      %1368 = vmatpush1.msra.mxu0 0.0
      %1369 = vmatprep.subr.mxu0 0.0
      %1370 = vmatpush1.msra.mxu0 0.0
      %1371 = vmatprep.subr.mxu0 0.0
      %1372 = vmatpush1.msra.mxu0 0.0
      %1373 = vmatprep.subr.mxu0 0.0
      %1374 = vmatpush1.msra.mxu0 0.0
      %1375 = vmatprep.subr.mxu0 0.0
      %1376 = vmatpush1.msra.mxu0 0.0
      %1377 = vmatprep.mubr.f32.mxu0 0.0
      %v1378 = vand.u32 %v1153, 4294901760
      %v1379 = vsub.f32 %v1153, %v1378
      %1380 = vmatmul.mubr.f32.gmra.mrb[0].mxu0 %v1379
      %v1381 = vpop.f32.mrb[0].mxu0
      %v1382 = vadd.f32 %v1308, %v1381
      %v1383 = vpop.f32.mrb[0].mxu0
      %1384 = vdwg.mxu0
      %1385 = vmatprep.subr.mxu0 0.0
      %v1386 = vand.u32 %v1157, 4294901760
      %1387 = vmatpush1.msra.mxu0 %v1386
      %1388 = vmatprep.subr.mxu0 0.0
      %1389 = vmatpush1.msra.mxu0 0.0
      %1390 = vmatprep.subr.mxu0 0.0
      %1391 = vmatpush1.msra.mxu0 0.0
      %1392 = vmatprep.subr.mxu0 0.0
      %1393 = vmatpush1.msra.mxu0 0.0
      %1394 = vmatprep.subr.mxu0 0.0
      %1395 = vmatpush1.msra.mxu0 0.0
      %1396 = vmatprep.subr.mxu0 0.0
      %1397 = vmatpush1.msra.mxu0 0.0
      %1398 = vmatprep.subr.mxu0 0.0
      %1399 = vmatpush1.msra.mxu0 0.0
      %1400 = vmatprep.subr.mxu0 0.0
      %1401 = vmatpush1.msra.mxu0 0.0
      %1402 = vmatprep.subr.mxu0 0.0
      %1403 = vmatpush1.msra.mxu0 0.0
      %1404 = vmatprep.subr.mxu0 0.0
      %1405 = vmatpush1.msra.mxu0 0.0
      %1406 = vmatprep.subr.mxu0 0.0
      %1407 = vmatpush1.msra.mxu0 0.0
      %1408 = vmatprep.subr.mxu0 0.0
      %1409 = vmatpush1.msra.mxu0 0.0
      %1410 = vmatprep.subr.mxu0 0.0
      %1411 = vmatpush1.msra.mxu0 0.0
      %1412 = vmatprep.subr.mxu0 0.0
      %1413 = vmatpush1.msra.mxu0 0.0
      %1414 = vmatprep.subr.mxu0 0.0
      %1415 = vmatpush1.msra.mxu0 0.0
      %1416 = vmatprep.subr.mxu0 0.0
      %1417 = vmatpush1.msra.mxu0 0.0
      %1418 = vmatprep.subr.mxu0 0.0
      %1419 = vmatpush1.msra.mxu0 0.0
      %1420 = vmatprep.subr.mxu0 0.0
      %1421 = vmatpush1.msra.mxu0 0.0
      %1422 = vmatprep.subr.mxu0 0.0
      %1423 = vmatpush1.msra.mxu0 0.0
      %1424 = vmatprep.subr.mxu0 0.0
      %1425 = vmatpush1.msra.mxu0 0.0
      %1426 = vmatprep.subr.mxu0 0.0
      %1427 = vmatpush1.msra.mxu0 0.0
      %1428 = vmatprep.subr.mxu0 0.0
      %1429 = vmatpush1.msra.mxu0 0.0
      %1430 = vmatprep.subr.mxu0 0.0
      %1431 = vmatpush1.msra.mxu0 0.0
      %1432 = vmatprep.subr.mxu0 0.0
      %1433 = vmatpush1.msra.mxu0 0.0
      %1434 = vmatprep.subr.mxu0 0.0
      %1435 = vmatpush1.msra.mxu0 0.0
      %1436 = vmatprep.subr.mxu0 0.0
      %1437 = vmatpush1.msra.mxu0 0.0
      %1438 = vmatprep.subr.mxu0 0.0
      %1439 = vmatpush1.msra.mxu0 0.0
      %1440 = vmatprep.subr.mxu0 0.0
      %1441 = vmatpush1.msra.mxu0 0.0
      %1442 = vmatprep.subr.mxu0 0.0
      %1443 = vmatpush1.msra.mxu0 0.0
      %1444 = vmatprep.subr.mxu0 0.0
      %1445 = vmatpush1.msra.mxu0 0.0
      %1446 = vmatprep.subr.mxu0 0.0
      %1447 = vmatpush1.msra.mxu0 0.0
      %1448 = vmatprep.subr.mxu0 0.0
      %1449 = vmatpush1.msra.mxu0 0.0
      %1450 = vmatprep.mubr.f32.mxu0 0.0
      %v1451 = vand.u32 %v1153, 4294901760
      %v1452 = vsub.f32 %v1153, %v1451
      %v1453 = vand.u32 %v1452, 4294901760
      %1454 = vmatmul.mubr.f32.gmra.mrb[0].mxu0 %v1453
      %v1455 = vpop.f32.mrb[0].mxu0
      %v1456 = vadd.f32 %v1382, %v1455
      %v1457 = vpop.f32.mrb[0].mxu0
      %1458 = vdwg.mxu0
      %1459 = vmatprep.subr.mxu0 0.0
      %v1460 = vand.u32 %v1157, 4294901760
      %v1461 = vsub.f32 %v1157, %v1460
      %v1462 = vand.u32 %v1461, 4294901760
      %1463 = vmatpush1.msra.mxu0 %v1462
      %1464 = vmatprep.subr.mxu0 0.0
      %1465 = vmatpush1.msra.mxu0 0.0
      %1466 = vmatprep.subr.mxu0 0.0
      %1467 = vmatpush1.msra.mxu0 0.0
      %1468 = vmatprep.subr.mxu0 0.0
      %1469 = vmatpush1.msra.mxu0 0.0
      %1470 = vmatprep.subr.mxu0 0.0
      %1471 = vmatpush1.msra.mxu0 0.0
      %1472 = vmatprep.subr.mxu0 0.0
      %1473 = vmatpush1.msra.mxu0 0.0
      %1474 = vmatprep.subr.mxu0 0.0
      %1475 = vmatpush1.msra.mxu0 0.0
      %1476 = vmatprep.subr.mxu0 0.0
      %1477 = vmatpush1.msra.mxu0 0.0
      %1478 = vmatprep.subr.mxu0 0.0
      %1479 = vmatpush1.msra.mxu0 0.0
      %1480 = vmatprep.subr.mxu0 0.0
      %1481 = vmatpush1.msra.mxu0 0.0
      %1482 = vmatprep.subr.mxu0 0.0
      %1483 = vmatpush1.msra.mxu0 0.0
      %1484 = vmatprep.subr.mxu0 0.0
      %1485 = vmatpush1.msra.mxu0 0.0
      %1486 = vmatprep.subr.mxu0 0.0
      %1487 = vmatpush1.msra.mxu0 0.0
      %1488 = vmatprep.subr.mxu0 0.0
      %1489 = vmatpush1.msra.mxu0 0.0
      %1490 = vmatprep.subr.mxu0 0.0
      %1491 = vmatpush1.msra.mxu0 0.0
      %1492 = vmatprep.subr.mxu0 0.0
      %1493 = vmatpush1.msra.mxu0 0.0
      %1494 = vmatprep.subr.mxu0 0.0
      %1495 = vmatpush1.msra.mxu0 0.0
      %1496 = vmatprep.subr.mxu0 0.0
      %1497 = vmatpush1.msra.mxu0 0.0
      %1498 = vmatprep.subr.mxu0 0.0
      %1499 = vmatpush1.msra.mxu0 0.0
      %1500 = vmatprep.subr.mxu0 0.0
      %1501 = vmatpush1.msra.mxu0 0.0
      %1502 = vmatprep.subr.mxu0 0.0
      %1503 = vmatpush1.msra.mxu0 0.0
      %1504 = vmatprep.subr.mxu0 0.0
      %1505 = vmatpush1.msra.mxu0 0.0
      %1506 = vmatprep.subr.mxu0 0.0
      %1507 = vmatpush1.msra.mxu0 0.0
      %1508 = vmatprep.subr.mxu0 0.0
      %1509 = vmatpush1.msra.mxu0 0.0
      %1510 = vmatprep.subr.mxu0 0.0
      %1511 = vmatpush1.msra.mxu0 0.0
      %1512 = vmatprep.subr.mxu0 0.0
      %1513 = vmatpush1.msra.mxu0 0.0
      %1514 = vmatprep.subr.mxu0 0.0
      %1515 = vmatpush1.msra.mxu0 0.0
      %1516 = vmatprep.subr.mxu0 0.0
      %1517 = vmatpush1.msra.mxu0 0.0
      %1518 = vmatprep.subr.mxu0 0.0
      %1519 = vmatpush1.msra.mxu0 0.0
      %1520 = vmatprep.subr.mxu0 0.0
      %1521 = vmatpush1.msra.mxu0 0.0
      %1522 = vmatprep.subr.mxu0 0.0
      %1523 = vmatpush1.msra.mxu0 0.0
      %1524 = vmatprep.subr.mxu0 0.0
      %1525 = vmatpush1.msra.mxu0 0.0
      %1526 = vmatprep.mubr.f32.mxu0 0.0
      %v1527 = vand.u32 %v1153, 4294901760
      %1528 = vmatmul.mubr.f32.gmra.mrb[0].mxu0 %v1527
      %v1529 = vpop.f32.mrb[0].mxu0
      %v1530 = vadd.f32 %v1456, %v1529
      %v1531 = vpop.f32.mrb[0].mxu0
      %1532 = vdwg.mxu0
      %1533 = vmatprep.subr.mxu0 0.0
      %v1534 = vand.u32 %v1157, 4294901760
      %1535 = vmatpush1.msra.mxu0 %v1534
      %1536 = vmatprep.subr.mxu0 0.0
      %1537 = vmatpush1.msra.mxu0 0.0
      %1538 = vmatprep.subr.mxu0 0.0
      %1539 = vmatpush1.msra.mxu0 0.0
      %1540 = vmatprep.subr.mxu0 0.0
      %1541 = vmatpush1.msra.mxu0 0.0
      %1542 = vmatprep.subr.mxu0 0.0
      %1543 = vmatpush1.msra.mxu0 0.0
      %1544 = vmatprep.subr.mxu0 0.0
      %1545 = vmatpush1.msra.mxu0 0.0
      %1546 = vmatprep.subr.mxu0 0.0
      %1547 = vmatpush1.msra.mxu0 0.0
      %1548 = vmatprep.subr.mxu0 0.0
      %1549 = vmatpush1.msra.mxu0 0.0
      %1550 = vmatprep.subr.mxu0 0.0
      %1551 = vmatpush1.msra.mxu0 0.0
      %1552 = vmatprep.subr.mxu0 0.0
      %1553 = vmatpush1.msra.mxu0 0.0
      %1554 = vmatprep.subr.mxu0 0.0
      %1555 = vmatpush1.msra.mxu0 0.0
      %1556 = vmatprep.subr.mxu0 0.0
      %1557 = vmatpush1.msra.mxu0 0.0
      %1558 = vmatprep.subr.mxu0 0.0
      %1559 = vmatpush1.msra.mxu0 0.0
      %1560 = vmatprep.subr.mxu0 0.0
      %1561 = vmatpush1.msra.mxu0 0.0
      %1562 = vmatprep.subr.mxu0 0.0
      %1563 = vmatpush1.msra.mxu0 0.0
      %1564 = vmatprep.subr.mxu0 0.0
      %1565 = vmatpush1.msra.mxu0 0.0
      %1566 = vmatprep.subr.mxu0 0.0
      %1567 = vmatpush1.msra.mxu0 0.0
      %1568 = vmatprep.subr.mxu0 0.0
      %1569 = vmatpush1.msra.mxu0 0.0
      %1570 = vmatprep.subr.mxu0 0.0
      %1571 = vmatpush1.msra.mxu0 0.0
      %1572 = vmatprep.subr.mxu0 0.0
      %1573 = vmatpush1.msra.mxu0 0.0
      %1574 = vmatprep.subr.mxu0 0.0
      %1575 = vmatpush1.msra.mxu0 0.0
      %1576 = vmatprep.subr.mxu0 0.0
      %1577 = vmatpush1.msra.mxu0 0.0
      %1578 = vmatprep.subr.mxu0 0.0
      %1579 = vmatpush1.msra.mxu0 0.0
      %1580 = vmatprep.subr.mxu0 0.0
      %1581 = vmatpush1.msra.mxu0 0.0
      %1582 = vmatprep.subr.mxu0 0.0
      %1583 = vmatpush1.msra.mxu0 0.0
      %1584 = vmatprep.subr.mxu0 0.0
      %1585 = vmatpush1.msra.mxu0 0.0
      %1586 = vmatprep.subr.mxu0 0.0
      %1587 = vmatpush1.msra.mxu0 0.0
      %1588 = vmatprep.subr.mxu0 0.0
      %1589 = vmatpush1.msra.mxu0 0.0
      %1590 = vmatprep.subr.mxu0 0.0
      %1591 = vmatpush1.msra.mxu0 0.0
      %1592 = vmatprep.subr.mxu0 0.0
      %1593 = vmatpush1.msra.mxu0 0.0
      %1594 = vmatprep.subr.mxu0 0.0
      %1595 = vmatpush1.msra.mxu0 0.0
      %1596 = vmatprep.subr.mxu0 0.0
      %1597 = vmatpush1.msra.mxu0 0.0
      %1598 = vmatprep.mubr.f32.mxu0 0.0
      %v1599 = vand.u32 %v1153, 4294901760
      %1600 = vmatmul.mubr.f32.gmra.mrb[0].mxu0 %v1599
      %v1601 = vpop.f32.mrb[0].mxu0
      %v1602 = vadd.f32 %v1530, %v1601
      %v1603 = vpop.f32.mrb[0].mxu0
      %1604 = vdwg.mxu0
      %v1607 = vunpack.c.l.s4 1966171168
      %v1608 = vunpack.c.0.s8 %v1607
      %v1609 = vlaneseq
      %v1610 = vshrl.u32 %v1609, 7
      %v1611 = vsub.s32 %v1608, %v1610
      %v1612 = vrot.slane %v1148, %v1611
      %v1613 = vcombine.high %v1612, %v1612
      %v1615 = vunpack.c.l.s4 1966171168
      %v1616 = vunpack.c.0.s8 %v1615
      %v1617 = vlaneseq
      %v1618 = vshrl.u32 %v1617, 7
      %v1619 = vsub.s32 %v1616, %v1618
      %v1620 = vrot.slane %v1612, %v1619
      %v1622 = vunpack.c.l.s4 1966171168
      %v1623 = vunpack.c.0.s8 %v1622
      %v1624 = vlaneseq
      %v1625 = vshrl.u32 %v1624, 7
      %v1626 = vsub.s32 %v1623, %v1625
      %v1627 = vrot.slane %v1613, %v1626
      %v1628 = vcombine.high %v1620, %v1620
      %v1629 = vlaneseq
      %v1630 = vshrl.u32 %v1629, 7
      %v1631 = vsub.s32 0, %v1630
      %v1632 = vrot.slane %v1620, %v1631
      %v1633 = vlaneseq
      %v1634 = vshrl.u32 %v1633, 7
      %v1635 = vsub.s32 0, %v1634
      %v1636 = vrot.slane %v1627, %v1635
      %v1637 = vlaneseq
      %v1638 = vshrl.u32 %v1637, 7
      %v1639 = vsub.s32 0, %v1638
      %v1640 = vrot.slane %v1628, %v1639
      %v1644 = vmul.f32 %v1632, %v1127
      %v1645 = vmul.f32 %v1636, %v1133
      %v1646 = vmul.f32 %v1640, %v1139
      %v1647 = vadd.f32 %v1644, %v1645
      %v1648 = vadd.f32 %v1647, %v1646
      %v1649 = vadd.f32 %v1648, %v1602
      %v1650 = vcombine.high %v1649, 0.0
      %v1652 = vunpack.c.l.s4 1983009808
      %v1653 = vunpack.c.0.s8 %v1652
      %v1654 = vlaneseq
      %v1655 = vshrl.u32 %v1654, 7
      %v1656 = vsub.s32 %v1653, %v1655
      %v1657 = vrot.slane %v1649, %v1656
      %v1659 = vunpack.c.l.s4 1983009808
      %v1660 = vunpack.c.0.s8 %v1659
      %v1661 = vlaneseq
      %v1662 = vshrl.u32 %v1661, 7
      %v1663 = vsub.s32 %v1660, %v1662
      %v1664 = vrot.slane %v1650, %v1663
      %v1665 = vcombine.high %v1657, 0.0
      %v1667 = vunpack.c.l.s4 1934713408
      %v1668 = vunpack.c.0.s8 %v1667
      %v1669 = vlaneseq
      %v1670 = vshrl.u32 %v1669, 7
      %v1671 = vsub.s32 %v1668, %v1670
      %v1672 = vrot.slane %v1657, %v1671
      %v1674 = vunpack.c.l.s4 1934713408
      %v1675 = vunpack.c.0.s8 %v1674
      %v1676 = vlaneseq
      %v1677 = vshrl.u32 %v1676, 7
      %v1678 = vsub.s32 %v1675, %v1677
      %v1679 = vrot.slane %v1665, %v1678
      %v1680 = vcombine.high %v1664, 0.0
      %v1682 = vunpack.c.l.s4 1934713408
      %v1683 = vunpack.c.0.s8 %v1682
      %v1684 = vlaneseq
      %v1685 = vshrl.u32 %v1684, 7
      %v1686 = vsub.s32 %v1683, %v1685
      %v1687 = vrot.slane %v1664, %v1686
      %v1689 = vunpack.c.l.s4 1934713408
      %v1690 = vunpack.c.0.s8 %v1689
      %v1691 = vlaneseq
      %v1692 = vshrl.u32 %v1691, 7
      %v1693 = vsub.s32 %v1690, %v1692
      %v1694 = vrot.slane %v1680, %v1693
      %v1695 = vcombine.high %v1672, 0.0
      %v1696 = vcombine.high %v1679, 0.0
      %v1697 = vcombine.high %v1687, 0.0
      %v1698 = vcombine.high %v1694, 0.0
      %v1699 = vld [vmem:[%s433] sm:$0x1]
      %v1701 = vlaneseq
      %v1702 = vshrl.u32 %v1701, 7
      %v1703 = vsub.s32 0, %v1702
      %v1704 = vrot.slane %v1699, %v1703
      %v1706 = vmul.f32 %v1704, %v443
      %v1708 = vrot.slane %v1706, 1
      %v1709 = vrot.slane %v1706, 2
      %v1710 = vrot.slane %v1706, 3
      %v1711 = vrot.slane %v1706, 4
      %v1712 = vrot.slane %v1706, 5
      %v1713 = vrot.slane %v1706, 6
      %v1714 = vrot.slane %v1706, 7
      %v1723 = vadd.f32 %v1672, %v1706
      %v1724 = vadd.f32 %v1695, %v1708
      %v1725 = vadd.f32 %v1679, %v1709
      %v1726 = vadd.f32 %v1696, %v1710
      %v1727 = vadd.f32 %v1687, %v1711
      %v1728 = vadd.f32 %v1697, %v1712
      %v1729 = vadd.f32 %v1694, %v1713
      %v1730 = vadd.f32 %v1698, %v1714
      %v1739 = vrot.slane %v1724, 7
      %vm1740 = vcmask 1041409
      %v1741 = vsel %vm1740, %v1739, %v1723
      %v1742 = vrot.slane %v1725, 6
      %vm1743 = vcmask 1042434
      %v1744 = vsel %vm1743, %v1742, %v1741
      %v1745 = vrot.slane %v1726, 5
      %vm1746 = vcmask 1043459
      %v1747 = vsel %vm1746, %v1745, %v1744
      %v1748 = vrot.slane %v1727, 4
      %vm1749 = vcmask 1044484
      %v1750 = vsel %vm1749, %v1748, %v1747
      %v1751 = vrot.slane %v1728, 3
      %vm1752 = vcmask 1045509
      %v1753 = vsel %vm1752, %v1751, %v1750
      %v1754 = vrot.slane %v1729, 2
      %vm1755 = vcmask 1046534
      %v1756 = vsel %vm1755, %v1754, %v1753
      %v1757 = vrot.slane %v1730, 1
      %vm1758 = vcmask 1047559
      %v1759 = vsel %vm1758, %v1757, %v1756
      %1761 = vst [vmem:[%s437] sm:$0xff] %v1759
      %v1762 = vld [vmem:[%s426] sm:$0x7]
      %1764 = vset.pattern.permute.xlu0 0
      %1765 = vperm.xlu0 %1764, %v1762
      %v1766 = vpop.permute.xlu0 %1765
      %v1768 = vmul.f32 %v1766, %v505
      %v1769 = vadd.f32 %v1145, %v1768
      %1770 = vst [vmem:[%s441] sm:$0x7] %v1769
      %p1771 = scmp.lt.s32.totalorder %s22, 3
      %s1772 = scalar_select %p1771, %s22, 3
      %s1773 = smul.addr %s1772, 8
      %s1774 = scalar_lea.vmem %s8, %s1773
      %p1775 = scmp.lt.s32.totalorder %s22, 3
      %s1776 = scalar_select %p1775, %s22, 3
      %s1777 = smul.addr %s1776, 4
      %s1778 = scalar_lea.vmem %s9, %s1777
      // Predicated region
      $region53: #{momentum_forward.1} parent=51 // pred_check
        %p1779 = pneg %p243
      $region54: #{momentum_forward.1} parent=51 // pred_check_branch
        %1781 = sbr.rel (%p1779) target = $region56
      $region55: #{momentum_forward.1} parent=51 // pred_region
        _
      $region56: #{momentum_forward.1} parent=51 // pred_fallthru
        _
      // Predicated region
      $region57: #{momentum_forward.1} parent=51 // pred_check
        %p1782 = pneg %p269
      $region58: #{momentum_forward.1} parent=51 // pred_check_branch
        %1784 = sbr.rel (%p1782) target = $region60
      $region59: #{momentum_forward.1} parent=51 // pred_region
        _
      $region60: #{momentum_forward.1} parent=51 // pred_fallthru
        _
    $region52: #{momentum_forward.1} parent=5 // pred_fallthru
      _
    %p1785 = scmp.le.s32.totalorder 2, %s17
    // Predicated region
    $region61: #{momentum_forward.1} parent=5 // pred_check
      %p1786 = pneg %p1785
    $region62: #{momentum_forward.1} parent=5 // pred_check_branch
      %1788 = sbr.rel (%p1786) target = $region64
    $region63: #{momentum_forward.1} parent=5 // pred_region
      %s1789 = ssub.s32 %s17, 2
      // Predicated region
      $region65: #{momentum_forward.1} parent=63 // pred_check
        %p1790 = pneg %p249
      $region66: #{momentum_forward.1} parent=63 // pred_check_branch
        %1792 = sbr.rel (%p1790) target = $region68
      $region67: #{momentum_forward.1} parent=63 // pred_region
        %p1793 = scmp.lt.s32.totalorder %s23, 3
        %s1794 = scalar_select %p1793, %s23, 3
        %s1795 = smul.addr %s1794, 8
        %s1796 = scalar_lea.vmem %s8, %s1795
      $region68: #{momentum_forward.1} parent=63 // pred_fallthru
        _
      // Predicated region
      $region69: #{momentum_forward.1} parent=63 // pred_check
        %p1797 = pneg %p275
      $region70: #{momentum_forward.1} parent=63 // pred_check_branch
        %1799 = sbr.rel (%p1797) target = $region72
      $region71: #{momentum_forward.1} parent=63 // pred_region
        %p1800 = scmp.lt.s32.totalorder %s23, 3
        %s1801 = scalar_select %p1800, %s23, 3
        %s1802 = smul.addr %s1801, 4
        %s1803 = scalar_lea.vmem %s9, %s1802
      $region72: #{momentum_forward.1} parent=63 // pred_fallthru
        _
    $region64: #{momentum_forward.1} parent=5 // pred_fallthru
      _
  $region6: #{momentum_forward.1} parent=0 // loop_footer
    %s21 = sadd.s32 1, %s17
  $region7: #{momentum_forward.1} parent=0 // loop_footer_branch
    %16 = sbr.rel target = $region3
  $region8: #{momentum_forward.1} parent=0 // loop_exit
    _

</llo_original>
